<compile_context>
chip_gen: v5e
topology: v5e:2x2
jax: 0.10.0
libtpu: 0.0.40
codegen_flags: <defaults>
</compile_context>

<pallas_src>
import jax
import jax.numpy as jnp
from jax import lax
from jax.experimental import pallas as pl
from jax.experimental.pallas import tpu as pltpu


# ----------------------- fused kernel: idx == 0 (head) -----------------------
def _make_head_kernel(slen, batch, vocab):
    def kernel(words_ref, embed_ref, wih_ref, whh_ref, b_ref,
               wa_ref, w1_ref, b1_ref, w2_ref, b2_ref, out_ref):
        d = whh_ref.shape[0]              # 2*u  (both LSTMs' hidden, concatenated)
        r = wa_ref.shape[1]
        n = slen * batch

        # -- embedding gather fused in-kernel: one-hot @ table on the MXU --
        ids = words_ref[...]                                           # (n, 1) int32
        vidx = lax.broadcasted_iota(jnp.int32, (n, vocab), 1)
        onehot = (vidx == ids).astype(jnp.float32)                     # (n, vocab)
        ef = jnp.dot(onehot, embed_ref[...],
                     preferred_element_type=jnp.float32)               # (n, e)

        # -- input projection for BOTH LSTMs hoisted out of the recurrence --
        gx = jnp.dot(ef, wih_ref[...],
                     preferred_element_type=jnp.float32) + b_ref[...]  # (n, 8u)

        whh = whh_ref[...]                                             # (2u, 8u)
        wa = wa_ref[...]                                               # (2u, r)
        w1 = w1_ref[...]                                               # (1, 2u)

        h = jnp.zeros((batch, d), jnp.float32)                         # [h1 | h2]
        c = jnp.zeros((batch, d), jnp.float32)
        m1_acc = jnp.zeros((batch, r), jnp.float32)

        # fused 2-LSTM recurrence, fully unrolled (slen static & tiny)
        for t in range(slen):
            gates = gx[t * batch:(t + 1) * batch, :] + jnp.dot(
                h, whh, preferred_element_type=jnp.float32)            # (batch, 8u)
            i = jax.nn.sigmoid(gates[:, 0 * d:1 * d])                  # [i1 i2]
            f = jax.nn.sigmoid(gates[:, 1 * d:2 * d])                  # [f1 f2]
            g = jnp.tanh(gates[:, 2 * d:3 * d])                        # [g1 g2]
            o = jax.nn.sigmoid(gates[:, 3 * d:4 * d])                  # [o1 o2]
            c = f * c + i * g
            h = o * jnp.tanh(c)                                        # == cat(h1, h2)
            # attention head folded into the recurrence:
            #   m1[b, j] = sum_s (h_s @ Wa)[b, j] * (h_s . w_mlp1)[b]
            a_t = jnp.dot(h, wa, preferred_element_type=jnp.float32)   # (batch, r)
            hw_t = jnp.sum(h * w1, axis=1, keepdims=True)              # (batch, 1)
            m1_acc = m1_acc + a_t * hw_t

        # mlp1: Linear(2u, 1) + ReLU  (already reduced over d above)
        m1 = jnp.maximum(m1_acc + b1_ref[...], 0.0)                    # (batch, r)
        # mlp2: Linear(r, c0) + ReLU
        m2 = jnp.dot(m1, w2_ref[...],
                     preferred_element_type=jnp.float32) + b2_ref[...] # (batch, c0)
        m2 = jnp.maximum(m2, 0.0)
        # F.softmax (legacy default dim=1 for a 2-D input)
        mx = jnp.max(m2, axis=-1, keepdims=True)
        e_ = jnp.exp(m2 - mx)
        denom = jnp.sum(e_, axis=-1, keepdims=True)
        out_ref[...] = e_ * pl.reciprocal(denom, approx=True)

    return kernel


# ---------------------- fused kernel: idx == 1 (tagger) ----------------------
def _make_tagger_kernel(slen, batch, vocab):
    def kernel(words_ref, embed_ref, wih_ref, whh_ref, b_ref,
               wt_ref, bt_ref, out_ref):
        u = whh_ref.shape[0]
        n = slen * batch

        ids = words_ref[...]                                           # (n, 1) int32
        vidx = lax.broadcasted_iota(jnp.int32, (n, vocab), 1)
        onehot = (vidx == ids).astype(jnp.float32)
        ef = jnp.dot(onehot, embed_ref[...],
                     preferred_element_type=jnp.float32)               # (n, e)

        gx = jnp.dot(ef, wih_ref[...],
                     preferred_element_type=jnp.float32) + b_ref[...]  # (n, 4u)

        whh = whh_ref[...]
        h = jnp.zeros((batch, u), jnp.float32)
        c = jnp.zeros((batch, u), jnp.float32)
        rows = []
        for t in range(slen):                                          # unrolled
            gates = gx[t * batch:(t + 1) * batch, :] + jnp.dot(
                h, whh, preferred_element_type=jnp.float32)            # (batch, 4u)
            i = jax.nn.sigmoid(gates[:, 0 * u:1 * u])
            f = jax.nn.sigmoid(gates[:, 1 * u:2 * u])
            g = jnp.tanh(gates[:, 2 * u:3 * u])
            o = jax.nn.sigmoid(gates[:, 3 * u:4 * u])
            c = f * c + i * g
            h = o * jnp.tanh(c)
            rows.append(h)

        # seq-major flatten == H.view(slen*batch, u); single lane-dense matmul
        hf = jnp.concatenate(rows, axis=0)                             # (n, u)
        out_ref[...] = (jnp.dot(hf, wt_ref[...],
                                preferred_element_type=jnp.float32) + bt_ref[...])

    return kernel


# ----------------------------- module forward -----------------------------
def _interleave_gates(a, b, u):
    """Interleave two (.., 4u) gate matrices into (.., 8u): [i1 i2 f1 f2 g1 g2 o1 o2]."""
    parts = []
    for k in range(4):
        parts.append(a[..., k * u:(k + 1) * u])
        parts.append(b[..., k * u:(k + 1) * u])
    return jnp.concatenate(parts, axis=-1)


def joint_lstm_forward(idx, words, p):
    slen, batch = words.shape
    vocab = p['embed_w'].shape[0]
    u = p['whh2'].shape[0]
    words_flat = words.reshape(slen * batch, 1).astype(jnp.int32)
    vmem = pl.BlockSpec(memory_space=pltpu.MemorySpace.VMEM)

    if idx == 0:
        # Merge the two independent LSTMs into one 8u-wide recurrence
        # (tiny, weights-only prep; the kernel itself is a single launch).
        wih_cat = _interleave_gates(p['wih1'], p['wih2'], u)           # (e, 8u)
        b_cat = _interleave_gates(p['b1'], p['b2'], u)                 # (1, 8u)
        zu = jnp.zeros_like(p['whh1'])
        whh_cat = jnp.concatenate(
            [_interleave_gates(p['whh1'], zu, u),
             _interleave_gates(zu, p['whh2'], u)], axis=0)             # (2u, 8u)
        c0 = p['w_mlp2'].shape[1]
        return pl.pallas_call(
            _make_head_kernel(slen, batch, vocab),
            out_shape=jax.ShapeDtypeStruct((batch, c0), jnp.float32),
            in_specs=[vmem] * 10,
            out_specs=vmem,
        )(words_flat, p['embed_w'], wih_cat, whh_cat, b_cat,
          p['w_attn1'], p['w_mlp1'], p['b_mlp1'], p['w_mlp2'], p['b_mlp2'])
    else:
        c1 = p['w_tag'].shape[1]
        return pl.pallas_call(
            _make_tagger_kernel(slen, batch, vocab),
            out_shape=jax.ShapeDtypeStruct((slen * batch, c1), jnp.float32),
            in_specs=[vmem] * 7,
            out_specs=vmem,
        )(words_flat, p['embed_w'], p['wih2'], p['whh2'], p['b2'],
          p['w_tag'], p['b_tag'])


# ---------------------------- pure-JAX reference ----------------------------
def _lstm_ref(x, wih_t, whh_t, b):
    u = whh_t.shape[0]
    batch = x.shape[1]

    def step(carry, x_t):
        h, c = carry
        gates = x_t @ wih_t + h @ whh_t + b
        i = jax.nn.sigmoid(gates[:, :u])
        f = jax.nn.sigmoid(gates[:, u:2 * u])
        g = jnp.tanh(gates[:, 2 * u:3 * u])
        o = jax.nn.sigmoid(gates[:, 3 * u:4 * u])
        c = f * c + i * g
        h = o * jnp.tanh(c)
        return (h, c), h

    h0 = jnp.zeros((batch, u), jnp.float32)
    (_, _), H = lax.scan(step, (h0, h0), x)
    return H


def joint_lstm_ref(idx, words, p):
    with jax.default_matmul_precision('highest'):
        embeds = jnp.take(p['embed_w'], words, axis=0)
        slen, batch, _ = embeds.shape
        if idx == 0:
            H1 = _lstm_ref(embeds, p['wih1'], p['whh1'], p['b1'])
            H2 = _lstm_ref(embeds, p['wih2'], p['whh2'], p['b2'])
            H = jnp.concatenate([H1, H2], axis=2)            # (s, b, 2u)
            A = jnp.einsum('sbd,dr->sbr', H, p['w_attn1'])
            Hb = jnp.transpose(H, (1, 0, 2))                  # (b, s, d)
            At = jnp.transpose(A, (1, 2, 0))                  # (b, r, s)
            M = jnp.einsum('brs,bsd->brd', At, Hb)
            m1 = jnp.maximum(jnp.sum(M * p['w_mlp1'], axis=-1) + p['b_mlp1'], 0.0)
            m2 = jnp.maximum(m1 @ p['w_mlp2'] + p['b_mlp2'], 0.0)
            return jax.nn.softmax(m2, axis=1)
        else:
            H2 = _lstm_ref(embeds, p['wih2'], p['whh2'], p['b2'])
            u = H2.shape[2]
            return H2.reshape(slen * batch, u) @ p['w_tag'] + p['b_tag']


# ----------------------------- parameter init -----------------------------
def init_params(key, v, e, u, r, c0, c1):
    ks = jax.random.split(key, 16)
    s = 0.1

    def n(k, shape):
        return jax.random.normal(k, shape, jnp.float32) * s

    d = 2 * u
    return {
        'embed_w': n(ks[0], (v, e)),
        # lstm1 / lstm2  (weights stored transposed, biases b_ih + b_hh fused)
        'wih1': n(ks[1], (e, 4 * u)), 'whh1': n(ks[2], (u, 4 * u)), 'b1': n(ks[3], (1, 4 * u)),
        'wih2': n(ks[4], (e, 4 * u)), 'whh2': n(ks[5], (u, 4 * u)), 'b2': n(ks[6], (1, 4 * u)),
        # attn1: Linear(2u, r, bias=False)
        'w_attn1': n(ks[7], (d, r)),
        # mlp1: Linear(2u, 1)
        'w_mlp1': n(ks[8], (1, d)), 'b_mlp1': n(ks[9], (1, 1)),
        # mlp2: Linear(r, c0)
        'w_mlp2': n(ks[10], (r, c0)), 'b_mlp2': n(ks[11], (1, c0)),
        # tagger: Linear(u, c1)
        'w_tag': n(ks[12], (u, c1)), 'b_tag': n(ks[13], (1, c1)),
    }


if __name__ == "__main__":
    # small shapes consistent with the module
    vocab, embed_dim, lstm_dim, r, c0, c1 = 50, 16, 32, 4, 3, 5
    slen, batch = 8, 2

    key = jax.random.PRNGKey(0)
    kp, kw = jax.random.split(key)
    params = init_params(kp, vocab, embed_dim, lstm_dim, r, c0, c1)
    words = jax.random.randint(kw, (slen, batch), 0, vocab, dtype=jnp.int32)

    out0 = joint_lstm_forward(0, words, params)   # (batch, c0) softmax probs
    out1 = joint_lstm_forward(1, words, params)   # (slen*batch, c1) tag logits
    jax.block_until_ready((out0, out1))

    ref0 = joint_lstm_ref(0, words, params)
    ref1 = joint_lstm_ref(1, words, params)
    assert out0.shape == (batch, c0) and out1.shape == (slen * batch, c1)
    assert jnp.allclose(out0, ref0, atol=2e-3, rtol=2e-3)
    assert jnp.allclose(out1, ref1, atol=2e-3, rtol=2e-3)

    print("KERNEL_OK")
</pallas_src>

<mosaic_0001>
module attributes {stable_mosaic.version = 11 : i64} {
  func.func @kernel(%arg0: memref<16x1xi32, #tpu.memory_space<vmem>>, %arg1: memref<50x16xf32, #tpu.memory_space<vmem>>, %arg2: memref<16x256xf32, #tpu.memory_space<vmem>>, %arg3: memref<64x256xf32, #tpu.memory_space<vmem>>, %arg4: memref<1x256xf32, #tpu.memory_space<vmem>>, %arg5: memref<64x4xf32, #tpu.memory_space<vmem>>, %arg6: memref<1x64xf32, #tpu.memory_space<vmem>>, %arg7: memref<1x1xf32, #tpu.memory_space<vmem>>, %arg8: memref<4x3xf32, #tpu.memory_space<vmem>>, %arg9: memref<1x3xf32, #tpu.memory_space<vmem>>, %arg10: memref<2x3xf32, #tpu.memory_space<vmem>>) attributes {dimension_semantics = [], scalar_prefetch = 0 : i64, scratch_operands = 0 : i64, tpu.core_type = #tpu.core_type<tc>} {
    %c0 = arith.constant 0 : index
    %c0_0 = arith.constant 0 : index
    %0 = vector.load %arg0[%c0, %c0_0] : memref<16x1xi32, #tpu.memory_space<vmem>>, vector<16x1xi32>
    %1 = tpu.iota {dimensions = array<i32: 1>} : vector<16x50xi32>
    %2 = vector.broadcast %0 : vector<16x1xi32> to vector<16x50xi32>
    %3 = arith.cmpi eq, %1, %2 : vector<16x50xi32>
    %4 = arith.extui %3 : vector<16x50xi1> to vector<16x50xi32>
    %5 = arith.sitofp %4 : vector<16x50xi32> to vector<16x50xf32>
    %c0_1 = arith.constant 0 : index
    %c0_2 = arith.constant 0 : index
    %6 = vector.load %arg1[%c0_1, %c0_2] : memref<50x16xf32, #tpu.memory_space<vmem>>, vector<50x16xf32>
    %cst = arith.constant dense<0.000000e+00> : vector<16x16xf32>
    %7 = tpu.matmul %5, %6, %cst {dimension_numbers = #tpu.dot_dimension_numbers<[1], [0], [0], [1], [0, 0, 1, 1], [], []>} : vector<16x50xf32>, vector<50x16xf32>, vector<16x16xf32> -> vector<16x16xf32>
    %c0_3 = arith.constant 0 : index
    %c0_4 = arith.constant 0 : index
    %8 = vector.load %arg2[%c0_3, %c0_4] : memref<16x256xf32, #tpu.memory_space<vmem>>, vector<16x256xf32>
    %cst_5 = arith.constant dense<0.000000e+00> : vector<16x256xf32>
    %9 = tpu.matmul %7, %8, %cst_5 {dimension_numbers = #tpu.dot_dimension_numbers<[1], [0], [0], [1], [0, 0, 1, 1], [], []>} : vector<16x16xf32>, vector<16x256xf32>, vector<16x256xf32> -> vector<16x256xf32>
    %c0_6 = arith.constant 0 : index
    %c0_7 = arith.constant 0 : index
    %10 = vector.load %arg4[%c0_6, %c0_7] : memref<1x256xf32, #tpu.memory_space<vmem>>, vector<1x256xf32>
    %11 = vector.broadcast %10 : vector<1x256xf32> to vector<16x256xf32>
    %12 = arith.addf %9, %11 : vector<16x256xf32>
    %c0_8 = arith.constant 0 : index
    %c0_9 = arith.constant 0 : index
    %13 = vector.load %arg3[%c0_8, %c0_9] : memref<64x256xf32, #tpu.memory_space<vmem>>, vector<64x256xf32>
    %c0_10 = arith.constant 0 : index
    %c0_11 = arith.constant 0 : index
    %14 = vector.load %arg5[%c0_10, %c0_11] : memref<64x4xf32, #tpu.memory_space<vmem>>, vector<64x4xf32>
    %c0_12 = arith.constant 0 : index
    %c0_13 = arith.constant 0 : index
    %15 = vector.load %arg6[%c0_12, %c0_13] : memref<1x64xf32, #tpu.memory_space<vmem>>, vector<1x64xf32>
    %cst_14 = arith.constant 0.000000e+00 : f32
    %16 = vector.broadcast %cst_14 : f32 to vector<2x64xf32>
    %cst_15 = arith.constant 0.000000e+00 : f32
    %17 = vector.broadcast %cst_15 : f32 to vector<2x64xf32>
    %cst_16 = arith.constant 0.000000e+00 : f32
    %18 = vector.broadcast %cst_16 : f32 to vector<2x4xf32>
    %19 = vector.extract_strided_slice %12 {offsets = [0, 0], sizes = [2, 256], strides = [1, 1]} : vector<16x256xf32> to vector<2x256xf32>
    %cst_17 = arith.constant dense<0.000000e+00> : vector<2x256xf32>
    %20 = tpu.matmul %16, %13, %cst_17 {dimension_numbers = #tpu.dot_dimension_numbers<[1], [0], [0], [1], [0, 0, 1, 1], [], []>} : vector<2x64xf32>, vector<64x256xf32>, vector<2x256xf32> -> vector<2x256xf32>
    %21 = arith.addf %19, %20 : vector<2x256xf32>
    %22 = vector.extract_strided_slice %21 {offsets = [0, 0], sizes = [2, 64], strides = [1, 1]} : vector<2x256xf32> to vector<2x64xf32>
    %23 = arith.negf %22 : vector<2x64xf32>
    %24 = math.exp %23 : vector<2x64xf32>
    %cst_18 = arith.constant 1.000000e+00 : f32
    %25 = vector.broadcast %cst_18 : f32 to vector<2x64xf32>
    %26 = arith.addf %25, %24 : vector<2x64xf32>
    %27 = arith.divf %25, %26 : vector<2x64xf32>
    %28 = vector.extract_strided_slice %21 {offsets = [0, 64], sizes = [2, 64], strides = [1, 1]} : vector<2x256xf32> to vector<2x64xf32>
    %29 = arith.negf %28 : vector<2x64xf32>
    %30 = math.exp %29 : vector<2x64xf32>
    %cst_19 = arith.constant 1.000000e+00 : f32
    %31 = vector.broadcast %cst_19 : f32 to vector<2x64xf32>
    %32 = arith.addf %31, %30 : vector<2x64xf32>
    %33 = arith.divf %31, %32 : vector<2x64xf32>
    %34 = vector.extract_strided_slice %21 {offsets = [0, 128], sizes = [2, 64], strides = [1, 1]} : vector<2x256xf32> to vector<2x64xf32>
    %35 = math.tanh %34 : vector<2x64xf32>
    %36 = vector.extract_strided_slice %21 {offsets = [0, 192], sizes = [2, 64], strides = [1, 1]} : vector<2x256xf32> to vector<2x64xf32>
    %37 = arith.negf %36 : vector<2x64xf32>
    %38 = math.exp %37 : vector<2x64xf32>
    %cst_20 = arith.constant 1.000000e+00 : f32
    %39 = vector.broadcast %cst_20 : f32 to vector<2x64xf32>
    %40 = arith.addf %39, %38 : vector<2x64xf32>
    %41 = arith.divf %39, %40 : vector<2x64xf32>
    %42 = arith.mulf %33, %17 : vector<2x64xf32>
    %43 = arith.mulf %27, %35 : vector<2x64xf32>
    %44 = arith.addf %42, %43 : vector<2x64xf32>
    %45 = math.tanh %44 : vector<2x64xf32>
    %46 = arith.mulf %41, %45 : vector<2x64xf32>
    %cst_21 = arith.constant dense<0.000000e+00> : vector<2x4xf32>
    %47 = tpu.matmul %46, %14, %cst_21 {dimension_numbers = #tpu.dot_dimension_numbers<[1], [0], [0], [1], [0, 0, 1, 1], [], []>} : vector<2x64xf32>, vector<64x4xf32>, vector<2x4xf32> -> vector<2x4xf32>
    %48 = vector.broadcast %15 : vector<1x64xf32> to vector<2x64xf32>
    %49 = arith.mulf %46, %48 : vector<2x64xf32>
    %cst_22 = arith.constant dense<0.000000e+00> : vector<2xf32>
    %50 = vector.multi_reduction <add>, %49, %cst_22 [1] : vector<2x64xf32> to vector<2xf32>
    %51 = vector.shape_cast %50 : vector<2xf32> to vector<2x1xf32>
    %52 = vector.broadcast %51 : vector<2x1xf32> to vector<2x4xf32>
    %53 = arith.mulf %47, %52 : vector<2x4xf32>
    %54 = arith.addf %18, %53 : vector<2x4xf32>
    %55 = vector.extract_strided_slice %12 {offsets = [2, 0], sizes = [2, 256], strides = [1, 1]} : vector<16x256xf32> to vector<2x256xf32>
    %cst_23 = arith.constant dense<0.000000e+00> : vector<2x256xf32>
    %56 = tpu.matmul %46, %13, %cst_23 {dimension_numbers = #tpu.dot_dimension_numbers<[1], [0], [0], [1], [0, 0, 1, 1], [], []>} : vector<2x64xf32>, vector<64x256xf32>, vector<2x256xf32> -> vector<2x256xf32>
    %57 = arith.addf %55, %56 : vector<2x256xf32>
    %58 = vector.extract_strided_slice %57 {offsets = [0, 0], sizes = [2, 64], strides = [1, 1]} : vector<2x256xf32> to vector<2x64xf32>
    %59 = arith.negf %58 : vector<2x64xf32>
    %60 = math.exp %59 : vector<2x64xf32>
    %cst_24 = arith.constant 1.000000e+00 : f32
    %61 = vector.broadcast %cst_24 : f32 to vector<2x64xf32>
    %62 = arith.addf %61, %60 : vector<2x64xf32>
    %63 = arith.divf %61, %62 : vector<2x64xf32>
    %64 = vector.extract_strided_slice %57 {offsets = [0, 64], sizes = [2, 64], strides = [1, 1]} : vector<2x256xf32> to vector<2x64xf32>
    %65 = arith.negf %64 : vector<2x64xf32>
    %66 = math.exp %65 : vector<2x64xf32>
    %cst_25 = arith.constant 1.000000e+00 : f32
    %67 = vector.broadcast %cst_25 : f32 to vector<2x64xf32>
    %68 = arith.addf %67, %66 : vector<2x64xf32>
    %69 = arith.divf %67, %68 : vector<2x64xf32>
    %70 = vector.extract_strided_slice %57 {offsets = [0, 128], sizes = [2, 64], strides = [1, 1]} : vector<2x256xf32> to vector<2x64xf32>
    %71 = math.tanh %70 : vector<2x64xf32>
    %72 = vector.extract_strided_slice %57 {offsets = [0, 192], sizes = [2, 64], strides = [1, 1]} : vector<2x256xf32> to vector<2x64xf32>
    %73 = arith.negf %72 : vector<2x64xf32>
    %74 = math.exp %73 : vector<2x64xf32>
    %cst_26 = arith.constant 1.000000e+00 : f32
    %75 = vector.broadcast %cst_26 : f32 to vector<2x64xf32>
    %76 = arith.addf %75, %74 : vector<2x64xf32>
    %77 = arith.divf %75, %76 : vector<2x64xf32>
    %78 = arith.mulf %69, %44 : vector<2x64xf32>
    %79 = arith.mulf %63, %71 : vector<2x64xf32>
    %80 = arith.addf %78, %79 : vector<2x64xf32>
    %81 = math.tanh %80 : vector<2x64xf32>
    %82 = arith.mulf %77, %81 : vector<2x64xf32>
    %cst_27 = arith.constant dense<0.000000e+00> : vector<2x4xf32>
    %83 = tpu.matmul %82, %14, %cst_27 {dimension_numbers = #tpu.dot_dimension_numbers<[1], [0], [0], [1], [0, 0, 1, 1], [], []>} : vector<2x64xf32>, vector<64x4xf32>, vector<2x4xf32> -> vector<2x4xf32>
    %84 = vector.broadcast %15 : vector<1x64xf32> to vector<2x64xf32>
    %85 = arith.mulf %82, %84 : vector<2x64xf32>
    %cst_28 = arith.constant dense<0.000000e+00> : vector<2xf32>
    %86 = vector.multi_reduction <add>, %85, %cst_28 [1] : vector<2x64xf32> to vector<2xf32>
    %87 = vector.shape_cast %86 : vector<2xf32> to vector<2x1xf32>
    %88 = vector.broadcast %87 : vector<2x1xf32> to vector<2x4xf32>
    %89 = arith.mulf %83, %88 : vector<2x4xf32>
    %90 = arith.addf %54, %89 : vector<2x4xf32>
    %91 = vector.extract_strided_slice %12 {offsets = [4, 0], sizes = [2, 256], strides = [1, 1]} : vector<16x256xf32> to vector<2x256xf32>
    %cst_29 = arith.constant dense<0.000000e+00> : vector<2x256xf32>
    %92 = tpu.matmul %82, %13, %cst_29 {dimension_numbers = #tpu.dot_dimension_numbers<[1], [0], [0], [1], [0, 0, 1, 1], [], []>} : vector<2x64xf32>, vector<64x256xf32>, vector<2x256xf32> -> vector<2x256xf32>
    %93 = arith.addf %91, %92 : vector<2x256xf32>
    %94 = vector.extract_strided_slice %93 {offsets = [0, 0], sizes = [2, 64], strides = [1, 1]} : vector<2x256xf32> to vector<2x64xf32>
    %95 = arith.negf %94 : vector<2x64xf32>
    %96 = math.exp %95 : vector<2x64xf32>
    %cst_30 = arith.constant 1.000000e+00 : f32
    %97 = vector.broadcast %cst_30 : f32 to vector<2x64xf32>
    %98 = arith.addf %97, %96 : vector<2x64xf32>
    %99 = arith.divf %97, %98 : vector<2x64xf32>
    %100 = vector.extract_strided_slice %93 {offsets = [0, 64], sizes = [2, 64], strides = [1, 1]} : vector<2x256xf32> to vector<2x64xf32>
    %101 = arith.negf %100 : vector<2x64xf32>
    %102 = math.exp %101 : vector<2x64xf32>
    %cst_31 = arith.constant 1.000000e+00 : f32
    %103 = vector.broadcast %cst_31 : f32 to vector<2x64xf32>
    %104 = arith.addf %103, %102 : vector<2x64xf32>
    %105 = arith.divf %103, %104 : vector<2x64xf32>
    %106 = vector.extract_strided_slice %93 {offsets = [0, 128], sizes = [2, 64], strides = [1, 1]} : vector<2x256xf32> to vector<2x64xf32>
    %107 = math.tanh %106 : vector<2x64xf32>
    %108 = vector.extract_strided_slice %93 {offsets = [0, 192], sizes = [2, 64], strides = [1, 1]} : vector<2x256xf32> to vector<2x64xf32>
    %109 = arith.negf %108 : vector<2x64xf32>
    %110 = math.exp %109 : vector<2x64xf32>
    %cst_32 = arith.constant 1.000000e+00 : f32
    %111 = vector.broadcast %cst_32 : f32 to vector<2x64xf32>
    %112 = arith.addf %111, %110 : vector<2x64xf32>
    %113 = arith.divf %111, %112 : vector<2x64xf32>
    %114 = arith.mulf %105, %80 : vector<2x64xf32>
    %115 = arith.mulf %99, %107 : vector<2x64xf32>
    %116 = arith.addf %114, %115 : vector<2x64xf32>
    %117 = math.tanh %116 : vector<2x64xf32>
    %118 = arith.mulf %113, %117 : vector<2x64xf32>
    %cst_33 = arith.constant dense<0.000000e+00> : vector<2x4xf32>
    %119 = tpu.matmul %118, %14, %cst_33 {dimension_numbers = #tpu.dot_dimension_numbers<[1], [0], [0], [1], [0, 0, 1, 1], [], []>} : vector<2x64xf32>, vector<64x4xf32>, vector<2x4xf32> -> vector<2x4xf32>
    %120 = vector.broadcast %15 : vector<1x64xf32> to vector<2x64xf32>
    %121 = arith.mulf %118, %120 : vector<2x64xf32>
    %cst_34 = arith.constant dense<0.000000e+00> : vector<2xf32>
    %122 = vector.multi_reduction <add>, %121, %cst_34 [1] : vector<2x64xf32> to vector<2xf32>
    %123 = vector.shape_cast %122 : vector<2xf32> to vector<2x1xf32>
    %124 = vector.broadcast %123 : vector<2x1xf32> to vector<2x4xf32>
    %125 = arith.mulf %119, %124 : vector<2x4xf32>
    %126 = arith.addf %90, %125 : vector<2x4xf32>
    %127 = vector.extract_strided_slice %12 {offsets = [6, 0], sizes = [2, 256], strides = [1, 1]} : vector<16x256xf32> to vector<2x256xf32>
    %cst_35 = arith.constant dense<0.000000e+00> : vector<2x256xf32>
    %128 = tpu.matmul %118, %13, %cst_35 {dimension_numbers = #tpu.dot_dimension_numbers<[1], [0], [0], [1], [0, 0, 1, 1], [], []>} : vector<2x64xf32>, vector<64x256xf32>, vector<2x256xf32> -> vector<2x256xf32>
    %129 = arith.addf %127, %128 : vector<2x256xf32>
    %130 = vector.extract_strided_slice %129 {offsets = [0, 0], sizes = [2, 64], strides = [1, 1]} : vector<2x256xf32> to vector<2x64xf32>
    %131 = arith.negf %130 : vector<2x64xf32>
    %132 = math.exp %131 : vector<2x64xf32>
    %cst_36 = arith.constant 1.000000e+00 : f32
    %133 = vector.broadcast %cst_36 : f32 to vector<2x64xf32>
    %134 = arith.addf %133, %132 : vector<2x64xf32>
    %135 = arith.divf %133, %134 : vector<2x64xf32>
    %136 = vector.extract_strided_slice %129 {offsets = [0, 64], sizes = [2, 64], strides = [1, 1]} : vector<2x256xf32> to vector<2x64xf32>
    %137 = arith.negf %136 : vector<2x64xf32>
    %138 = math.exp %137 : vector<2x64xf32>
    %cst_37 = arith.constant 1.000000e+00 : f32
    %139 = vector.broadcast %cst_37 : f32 to vector<2x64xf32>
    %140 = arith.addf %139, %138 : vector<2x64xf32>
    %141 = arith.divf %139, %140 : vector<2x64xf32>
    %142 = vector.extract_strided_slice %129 {offsets = [0, 128], sizes = [2, 64], strides = [1, 1]} : vector<2x256xf32> to vector<2x64xf32>
    %143 = math.tanh %142 : vector<2x64xf32>
    %144 = vector.extract_strided_slice %129 {offsets = [0, 192], sizes = [2, 64], strides = [1, 1]} : vector<2x256xf32> to vector<2x64xf32>
    %145 = arith.negf %144 : vector<2x64xf32>
    %146 = math.exp %145 : vector<2x64xf32>
    %cst_38 = arith.constant 1.000000e+00 : f32
    %147 = vector.broadcast %cst_38 : f32 to vector<2x64xf32>
    %148 = arith.addf %147, %146 : vector<2x64xf32>
    %149 = arith.divf %147, %148 : vector<2x64xf32>
    %150 = arith.mulf %141, %116 : vector<2x64xf32>
    %151 = arith.mulf %135, %143 : vector<2x64xf32>
    %152 = arith.addf %150, %151 : vector<2x64xf32>
    %153 = math.tanh %152 : vector<2x64xf32>
    %154 = arith.mulf %149, %153 : vector<2x64xf32>
    %cst_39 = arith.constant dense<0.000000e+00> : vector<2x4xf32>
    %155 = tpu.matmul %154, %14, %cst_39 {dimension_numbers = #tpu.dot_dimension_numbers<[1], [0], [0], [1], [0, 0, 1, 1], [], []>} : vector<2x64xf32>, vector<64x4xf32>, vector<2x4xf32> -> vector<2x4xf32>
    %156 = vector.broadcast %15 : vector<1x64xf32> to vector<2x64xf32>
    %157 = arith.mulf %154, %156 : vector<2x64xf32>
    %cst_40 = arith.constant dense<0.000000e+00> : vector<2xf32>
    %158 = vector.multi_reduction <add>, %157, %cst_40 [1] : vector<2x64xf32> to vector<2xf32>
    %159 = vector.shape_cast %158 : vector<2xf32> to vector<2x1xf32>
    %160 = vector.broadcast %159 : vector<2x1xf32> to vector<2x4xf32>
    %161 = arith.mulf %155, %160 : vector<2x4xf32>
    %162 = arith.addf %126, %161 : vector<2x4xf32>
    %163 = vector.extract_strided_slice %12 {offsets = [8, 0], sizes = [2, 256], strides = [1, 1]} : vector<16x256xf32> to vector<2x256xf32>
    %cst_41 = arith.constant dense<0.000000e+00> : vector<2x256xf32>
    %164 = tpu.matmul %154, %13, %cst_41 {dimension_numbers = #tpu.dot_dimension_numbers<[1], [0], [0], [1], [0, 0, 1, 1], [], []>} : vector<2x64xf32>, vector<64x256xf32>, vector<2x256xf32> -> vector<2x256xf32>
    %165 = arith.addf %163, %164 : vector<2x256xf32>
    %166 = vector.extract_strided_slice %165 {offsets = [0, 0], sizes = [2, 64], strides = [1, 1]} : vector<2x256xf32> to vector<2x64xf32>
    %167 = arith.negf %166 : vector<2x64xf32>
    %168 = math.exp %167 : vector<2x64xf32>
    %cst_42 = arith.constant 1.000000e+00 : f32
    %169 = vector.broadcast %cst_42 : f32 to vector<2x64xf32>
    %170 = arith.addf %169, %168 : vector<2x64xf32>
    %171 = arith.divf %169, %170 : vector<2x64xf32>
    %172 = vector.extract_strided_slice %165 {offsets = [0, 64], sizes = [2, 64], strides = [1, 1]} : vector<2x256xf32> to vector<2x64xf32>
    %173 = arith.negf %172 : vector<2x64xf32>
    %174 = math.exp %173 : vector<2x64xf32>
    %cst_43 = arith.constant 1.000000e+00 : f32
    %175 = vector.broadcast %cst_43 : f32 to vector<2x64xf32>
    %176 = arith.addf %175, %174 : vector<2x64xf32>
    %177 = arith.divf %175, %176 : vector<2x64xf32>
    %178 = vector.extract_strided_slice %165 {offsets = [0, 128], sizes = [2, 64], strides = [1, 1]} : vector<2x256xf32> to vector<2x64xf32>
    %179 = math.tanh %178 : vector<2x64xf32>
    %180 = vector.extract_strided_slice %165 {offsets = [0, 192], sizes = [2, 64], strides = [1, 1]} : vector<2x256xf32> to vector<2x64xf32>
    %181 = arith.negf %180 : vector<2x64xf32>
    %182 = math.exp %181 : vector<2x64xf32>
    %cst_44 = arith.constant 1.000000e+00 : f32
    %183 = vector.broadcast %cst_44 : f32 to vector<2x64xf32>
    %184 = arith.addf %183, %182 : vector<2x64xf32>
    %185 = arith.divf %183, %184 : vector<2x64xf32>
    %186 = arith.mulf %177, %152 : vector<2x64xf32>
    %187 = arith.mulf %171, %179 : vector<2x64xf32>
    %188 = arith.addf %186, %187 : vector<2x64xf32>
    %189 = math.tanh %188 : vector<2x64xf32>
    %190 = arith.mulf %185, %189 : vector<2x64xf32>
    %cst_45 = arith.constant dense<0.000000e+00> : vector<2x4xf32>
    %191 = tpu.matmul %190, %14, %cst_45 {dimension_numbers = #tpu.dot_dimension_numbers<[1], [0], [0], [1], [0, 0, 1, 1], [], []>} : vector<2x64xf32>, vector<64x4xf32>, vector<2x4xf32> -> vector<2x4xf32>
    %192 = vector.broadcast %15 : vector<1x64xf32> to vector<2x64xf32>
    %193 = arith.mulf %190, %192 : vector<2x64xf32>
    %cst_46 = arith.constant dense<0.000000e+00> : vector<2xf32>
    %194 = vector.multi_reduction <add>, %193, %cst_46 [1] : vector<2x64xf32> to vector<2xf32>
    %195 = vector.shape_cast %194 : vector<2xf32> to vector<2x1xf32>
    %196 = vector.broadcast %195 : vector<2x1xf32> to vector<2x4xf32>
    %197 = arith.mulf %191, %196 : vector<2x4xf32>
    %198 = arith.addf %162, %197 : vector<2x4xf32>
    %199 = vector.extract_strided_slice %12 {offsets = [10, 0], sizes = [2, 256], strides = [1, 1]} : vector<16x256xf32> to vector<2x256xf32>
    %cst_47 = arith.constant dense<0.000000e+00> : vector<2x256xf32>
    %200 = tpu.matmul %190, %13, %cst_47 {dimension_numbers = #tpu.dot_dimension_numbers<[1], [0], [0], [1], [0, 0, 1, 1], [], []>} : vector<2x64xf32>, vector<64x256xf32>, vector<2x256xf32> -> vector<2x256xf32>
    %201 = arith.addf %199, %200 : vector<2x256xf32>
    %202 = vector.extract_strided_slice %201 {offsets = [0, 0], sizes = [2, 64], strides = [1, 1]} : vector<2x256xf32> to vector<2x64xf32>
    %203 = arith.negf %202 : vector<2x64xf32>
    %204 = math.exp %203 : vector<2x64xf32>
    %cst_48 = arith.constant 1.000000e+00 : f32
    %205 = vector.broadcast %cst_48 : f32 to vector<2x64xf32>
    %206 = arith.addf %205, %204 : vector<2x64xf32>
    %207 = arith.divf %205, %206 : vector<2x64xf32>
    %208 = vector.extract_strided_slice %201 {offsets = [0, 64], sizes = [2, 64], strides = [1, 1]} : vector<2x256xf32> to vector<2x64xf32>
    %209 = arith.negf %208 : vector<2x64xf32>
    %210 = math.exp %209 : vector<2x64xf32>
    %cst_49 = arith.constant 1.000000e+00 : f32
    %211 = vector.broadcast %cst_49 : f32 to vector<2x64xf32>
    %212 = arith.addf %211, %210 : vector<2x64xf32>
    %213 = arith.divf %211, %212 : vector<2x64xf32>
    %214 = vector.extract_strided_slice %201 {offsets = [0, 128], sizes = [2, 64], strides = [1, 1]} : vector<2x256xf32> to vector<2x64xf32>
    %215 = math.tanh %214 : vector<2x64xf32>
    %216 = vector.extract_strided_slice %201 {offsets = [0, 192], sizes = [2, 64], strides = [1, 1]} : vector<2x256xf32> to vector<2x64xf32>
    %217 = arith.negf %216 : vector<2x64xf32>
    %218 = math.exp %217 : vector<2x64xf32>
    %cst_50 = arith.constant 1.000000e+00 : f32
    %219 = vector.broadcast %cst_50 : f32 to vector<2x64xf32>
    %220 = arith.addf %219, %218 : vector<2x64xf32>
    %221 = arith.divf %219, %220 : vector<2x64xf32>
    %222 = arith.mulf %213, %188 : vector<2x64xf32>
    %223 = arith.mulf %207, %215 : vector<2x64xf32>
    %224 = arith.addf %222, %223 : vector<2x64xf32>
    %225 = math.tanh %224 : vector<2x64xf32>
    %226 = arith.mulf %221, %225 : vector<2x64xf32>
    %cst_51 = arith.constant dense<0.000000e+00> : vector<2x4xf32>
    %227 = tpu.matmul %226, %14, %cst_51 {dimension_numbers = #tpu.dot_dimension_numbers<[1], [0], [0], [1], [0, 0, 1, 1], [], []>} : vector<2x64xf32>, vector<64x4xf32>, vector<2x4xf32> -> vector<2x4xf32>
    %228 = vector.broadcast %15 : vector<1x64xf32> to vector<2x64xf32>
    %229 = arith.mulf %226, %228 : vector<2x64xf32>
    %cst_52 = arith.constant dense<0.000000e+00> : vector<2xf32>
    %230 = vector.multi_reduction <add>, %229, %cst_52 [1] : vector<2x64xf32> to vector<2xf32>
    %231 = vector.shape_cast %230 : vector<2xf32> to vector<2x1xf32>
    %232 = vector.broadcast %231 : vector<2x1xf32> to vector<2x4xf32>
    %233 = arith.mulf %227, %232 : vector<2x4xf32>
    %234 = arith.addf %198, %233 : vector<2x4xf32>
    %235 = vector.extract_strided_slice %12 {offsets = [12, 0], sizes = [2, 256], strides = [1, 1]} : vector<16x256xf32> to vector<2x256xf32>
    %cst_53 = arith.constant dense<0.000000e+00> : vector<2x256xf32>
    %236 = tpu.matmul %226, %13, %cst_53 {dimension_numbers = #tpu.dot_dimension_numbers<[1], [0], [0], [1], [0, 0, 1, 1], [], []>} : vector<2x64xf32>, vector<64x256xf32>, vector<2x256xf32> -> vector<2x256xf32>
    %237 = arith.addf %235, %236 : vector<2x256xf32>
    %238 = vector.extract_strided_slice %237 {offsets = [0, 0], sizes = [2, 64], strides = [1, 1]} : vector<2x256xf32> to vector<2x64xf32>
    %239 = arith.negf %238 : vector<2x64xf32>
    %240 = math.exp %239 : vector<2x64xf32>
    %cst_54 = arith.constant 1.000000e+00 : f32
    %241 = vector.broadcast %cst_54 : f32 to vector<2x64xf32>
    %242 = arith.addf %241, %240 : vector<2x64xf32>
    %243 = arith.divf %241, %242 : vector<2x64xf32>
    %244 = vector.extract_strided_slice %237 {offsets = [0, 64], sizes = [2, 64], strides = [1, 1]} : vector<2x256xf32> to vector<2x64xf32>
    %245 = arith.negf %244 : vector<2x64xf32>
    %246 = math.exp %245 : vector<2x64xf32>
    %cst_55 = arith.constant 1.000000e+00 : f32
    %247 = vector.broadcast %cst_55 : f32 to vector<2x64xf32>
    %248 = arith.addf %247, %246 : vector<2x64xf32>
    %249 = arith.divf %247, %248 : vector<2x64xf32>
    %250 = vector.extract_strided_slice %237 {offsets = [0, 128], sizes = [2, 64], strides = [1, 1]} : vector<2x256xf32> to vector<2x64xf32>
    %251 = math.tanh %250 : vector<2x64xf32>
    %252 = vector.extract_strided_slice %237 {offsets = [0, 192], sizes = [2, 64], strides = [1, 1]} : vector<2x256xf32> to vector<2x64xf32>
    %253 = arith.negf %252 : vector<2x64xf32>
    %254 = math.exp %253 : vector<2x64xf32>
    %cst_56 = arith.constant 1.000000e+00 : f32
    %255 = vector.broadcast %cst_56 : f32 to vector<2x64xf32>
    %256 = arith.addf %255, %254 : vector<2x64xf32>
    %257 = arith.divf %255, %256 : vector<2x64xf32>
    %258 = arith.mulf %249, %224 : vector<2x64xf32>
    %259 = arith.mulf %243, %251 : vector<2x64xf32>
    %260 = arith.addf %258, %259 : vector<2x64xf32>
    %261 = math.tanh %260 : vector<2x64xf32>
    %262 = arith.mulf %257, %261 : vector<2x64xf32>
    %cst_57 = arith.constant dense<0.000000e+00> : vector<2x4xf32>
    %263 = tpu.matmul %262, %14, %cst_57 {dimension_numbers = #tpu.dot_dimension_numbers<[1], [0], [0], [1], [0, 0, 1, 1], [], []>} : vector<2x64xf32>, vector<64x4xf32>, vector<2x4xf32> -> vector<2x4xf32>
    %264 = vector.broadcast %15 : vector<1x64xf32> to vector<2x64xf32>
    %265 = arith.mulf %262, %264 : vector<2x64xf32>
    %cst_58 = arith.constant dense<0.000000e+00> : vector<2xf32>
    %266 = vector.multi_reduction <add>, %265, %cst_58 [1] : vector<2x64xf32> to vector<2xf32>
    %267 = vector.shape_cast %266 : vector<2xf32> to vector<2x1xf32>
    %268 = vector.broadcast %267 : vector<2x1xf32> to vector<2x4xf32>
    %269 = arith.mulf %263, %268 : vector<2x4xf32>
    %270 = arith.addf %234, %269 : vector<2x4xf32>
    %271 = vector.extract_strided_slice %12 {offsets = [14, 0], sizes = [2, 256], strides = [1, 1]} : vector<16x256xf32> to vector<2x256xf32>
    %cst_59 = arith.constant dense<0.000000e+00> : vector<2x256xf32>
    %272 = tpu.matmul %262, %13, %cst_59 {dimension_numbers = #tpu.dot_dimension_numbers<[1], [0], [0], [1], [0, 0, 1, 1], [], []>} : vector<2x64xf32>, vector<64x256xf32>, vector<2x256xf32> -> vector<2x256xf32>
    %273 = arith.addf %271, %272 : vector<2x256xf32>
    %274 = vector.extract_strided_slice %273 {offsets = [0, 0], sizes = [2, 64], strides = [1, 1]} : vector<2x256xf32> to vector<2x64xf32>
    %275 = arith.negf %274 : vector<2x64xf32>
    %276 = math.exp %275 : vector<2x64xf32>
    %cst_60 = arith.constant 1.000000e+00 : f32
    %277 = vector.broadcast %cst_60 : f32 to vector<2x64xf32>
    %278 = arith.addf %277, %276 : vector<2x64xf32>
    %279 = arith.divf %277, %278 : vector<2x64xf32>
    %280 = vector.extract_strided_slice %273 {offsets = [0, 64], sizes = [2, 64], strides = [1, 1]} : vector<2x256xf32> to vector<2x64xf32>
    %281 = arith.negf %280 : vector<2x64xf32>
    %282 = math.exp %281 : vector<2x64xf32>
    %cst_61 = arith.constant 1.000000e+00 : f32
    %283 = vector.broadcast %cst_61 : f32 to vector<2x64xf32>
    %284 = arith.addf %283, %282 : vector<2x64xf32>
    %285 = arith.divf %283, %284 : vector<2x64xf32>
    %286 = vector.extract_strided_slice %273 {offsets = [0, 128], sizes = [2, 64], strides = [1, 1]} : vector<2x256xf32> to vector<2x64xf32>
    %287 = math.tanh %286 : vector<2x64xf32>
    %288 = vector.extract_strided_slice %273 {offsets = [0, 192], sizes = [2, 64], strides = [1, 1]} : vector<2x256xf32> to vector<2x64xf32>
    %289 = arith.negf %288 : vector<2x64xf32>
    %290 = math.exp %289 : vector<2x64xf32>
    %cst_62 = arith.constant 1.000000e+00 : f32
    %291 = vector.broadcast %cst_62 : f32 to vector<2x64xf32>
    %292 = arith.addf %291, %290 : vector<2x64xf32>
    %293 = arith.divf %291, %292 : vector<2x64xf32>
    %294 = arith.mulf %285, %260 : vector<2x64xf32>
    %295 = arith.mulf %279, %287 : vector<2x64xf32>
    %296 = arith.addf %294, %295 : vector<2x64xf32>
    %297 = math.tanh %296 : vector<2x64xf32>
    %298 = arith.mulf %293, %297 : vector<2x64xf32>
    %cst_63 = arith.constant dense<0.000000e+00> : vector<2x4xf32>
    %299 = tpu.matmul %298, %14, %cst_63 {dimension_numbers = #tpu.dot_dimension_numbers<[1], [0], [0], [1], [0, 0, 1, 1], [], []>} : vector<2x64xf32>, vector<64x4xf32>, vector<2x4xf32> -> vector<2x4xf32>
    %300 = vector.broadcast %15 : vector<1x64xf32> to vector<2x64xf32>
    %301 = arith.mulf %298, %300 : vector<2x64xf32>
    %cst_64 = arith.constant dense<0.000000e+00> : vector<2xf32>
    %302 = vector.multi_reduction <add>, %301, %cst_64 [1] : vector<2x64xf32> to vector<2xf32>
    %303 = vector.shape_cast %302 : vector<2xf32> to vector<2x1xf32>
    %304 = vector.broadcast %303 : vector<2x1xf32> to vector<2x4xf32>
    %305 = arith.mulf %299, %304 : vector<2x4xf32>
    %306 = arith.addf %270, %305 : vector<2x4xf32>
    %c0_65 = arith.constant 0 : index
    %c0_66 = arith.constant 0 : index
    %307 = vector.load %arg7[%c0_65, %c0_66] : memref<1x1xf32, #tpu.memory_space<vmem>>, vector<1x1xf32>
    %308 = vector.broadcast %307 : vector<1x1xf32> to vector<2x4xf32>
    %309 = arith.addf %306, %308 : vector<2x4xf32>
    %cst_67 = arith.constant 0.000000e+00 : f32
    %310 = vector.broadcast %cst_67 : f32 to vector<2x4xf32>
    %311 = arith.maximumf %309, %310 : vector<2x4xf32>
    %c0_68 = arith.constant 0 : index
    %c0_69 = arith.constant 0 : index
    %312 = vector.load %arg8[%c0_68, %c0_69] : memref<4x3xf32, #tpu.memory_space<vmem>>, vector<4x3xf32>
    %cst_70 = arith.constant dense<0.000000e+00> : vector<2x3xf32>
    %313 = tpu.matmul %311, %312, %cst_70 {dimension_numbers = #tpu.dot_dimension_numbers<[1], [0], [0], [1], [0, 0, 1, 1], [], []>} : vector<2x4xf32>, vector<4x3xf32>, vector<2x3xf32> -> vector<2x3xf32>
    %c0_71 = arith.constant 0 : index
    %c0_72 = arith.constant 0 : index
    %314 = vector.load %arg9[%c0_71, %c0_72] : memref<1x3xf32, #tpu.memory_space<vmem>>, vector<1x3xf32>
    %315 = vector.broadcast %314 : vector<1x3xf32> to vector<2x3xf32>
    %316 = arith.addf %313, %315 : vector<2x3xf32>
    %cst_73 = arith.constant 0.000000e+00 : f32
    %317 = vector.broadcast %cst_73 : f32 to vector<2x3xf32>
    %318 = arith.maximumf %316, %317 : vector<2x3xf32>
    %cst_74 = arith.constant dense<0xFF800000> : vector<2xf32>
    %319 = vector.multi_reduction <maximumf>, %318, %cst_74 [1] : vector<2x3xf32> to vector<2xf32>
    %320 = vector.shape_cast %319 : vector<2xf32> to vector<2x1xf32>
    %321 = vector.broadcast %320 : vector<2x1xf32> to vector<2x3xf32>
    %322 = arith.subf %318, %321 : vector<2x3xf32>
    %323 = math.exp %322 : vector<2x3xf32>
    %cst_75 = arith.constant dense<0.000000e+00> : vector<2xf32>
    %324 = vector.multi_reduction <add>, %323, %cst_75 [1] : vector<2x3xf32> to vector<2xf32>
    %325 = vector.shape_cast %324 : vector<2xf32> to vector<2x1xf32>
    %326 = tpu.reciprocal %325 {approx = true} : vector<2x1xf32> -> vector<2x1xf32>
    %327 = vector.broadcast %326 : vector<2x1xf32> to vector<2x3xf32>
    %328 = arith.mulf %323, %327 : vector<2x3xf32>
    %c0_76 = arith.constant 0 : index
    %c0_77 = arith.constant 0 : index
    %329 = vector.load %arg10[%c0_76, %c0_77] : memref<2x3xf32, #tpu.memory_space<vmem>>, vector<2x3xf32>
    tpu.vector_store %arg10[%c0_76, %c0_77], %328 {strides = array<i32>} : memref<2x3xf32, #tpu.memory_space<vmem>>, vector<2x3xf32>,
    return
  }
}

</mosaic_0001>

<llo_original>
// kernel: tpu_custom_call.1
$region0: #{tpu_custom_call.1}
  #allocation0 [shape = 'u32[]', space=smem, size = 0x4, offset = 0x4, fixed_abs, tag = 'smem constant byte address 0x4 - core index']
  #allocation1 [shape = 'u32[72,128]{1,0:T(1,128)}', space=vmem, size = 0x9000, scoped, tag = 'internal scratch']
  #allocation2 [shape = 'f32[1,1]{1,0:T(1,128)S(1)}', space=vmem, size = 0x200, scoped, tag = 'scoped memory for tpu_custom_call.1']
  %s0 = inlined_call_operand.vmem [shape: s32[16,1], index: 0, kind: input, shape index: {}]
  %s1 = inlined_call_operand.vmem [shape: f32[50,16], index: 1, kind: input, shape index: {}]
  %s2 = inlined_call_operand.hbm [shape: f32[16,256], index: 2, kind: input, shape index: {}]
  %s3 = inlined_call_operand.vmem [shape: f32[64,256], index: 3, kind: input, shape index: {}]
  %s4 = inlined_call_operand.vmem [shape: f32[1,256], index: 4, kind: input, shape index: {}]
  %s5 = inlined_call_operand.vmem [shape: f32[64,4], index: 5, kind: input, shape index: {}]
  %s6 = inlined_call_operand.vmem [shape: f32[1,64], index: 6, kind: input, shape index: {}]
  %s7 = inlined_call_operand.<no memory space> [shape: f32[1,1], index: 7, kind: input, shape index: {}]
  %s8 = inlined_call_operand.vmem [shape: f32[4,3], index: 8, kind: input, shape index: {}]
  %s9 = inlined_call_operand.vmem [shape: f32[1,3], index: 9, kind: input, shape index: {}]
  %s10 = inlined_call_operand.hbm [shape: f32[2,3], index: 10, kind: output, shape index: {}]
  %s11 = sld [smem:[#allocation0]]
  $region54: #{tpu_custom_call.1} parent=0
    _
  %s13 = ssub.s32 1, %s11
  %s14 = scalar_select 0, %s13, %s11
  %v15 = vstv %s7
  %16 = vst [vmem:[#allocation2] sm:$0x1] %v15
  $region1: #{tpu_custom_call.1} parent=0
    #allocation3 [shape = 'u8[16384]{0}', space=vmem, size = 0x4000, scoped, tag = 'input window, operand 2, single buffered']
    #allocation4 [shape = 's32[1]{0}', space=sflag, size = 0x4, scoped, tag = 'scoped memory for tpu_custom_call.1']
    #allocation5 [shape = 's32[1]{0}', space=sflag, size = 0x4, scoped, tag = 'scoped memory for tpu_custom_call.1']
    #allocation6 [shape = 'u8[1024]{0}', space=vmem, size = 0x400, scoped, tag = 'output window, operand 0, single buffered']
    %17 = vsyncpa [#allocation4], 0
    %18 = vsyncpa [#allocation5], 0
    // Predicated region
    $region2: #{tpu_custom_call.1} parent=1 // pred_check
      _
    $region3: #{tpu_custom_call.1} parent=1 // pred_check_branch
      %20 = sbr.rel (0) target = $region5
    $region4: #{tpu_custom_call.1} parent=1 // pred_region
      _
    $region5: #{tpu_custom_call.1} parent=1 // pred_fallthru
      _
    // Predicated region
    $region6: #{tpu_custom_call.1} parent=1 // pred_check
      _
    $region7: #{tpu_custom_call.1} parent=1 // pred_check_branch
      %22 = sbr.rel (0) target = $region9
    $region8: #{tpu_custom_call.1} parent=1 // pred_region
      _
    $region9: #{tpu_custom_call.1} parent=1 // pred_fallthru
      _
    // Predicated region
    $region10: #{tpu_custom_call.1} parent=1 // pred_check
      _
    $region11: #{tpu_custom_call.1} parent=1 // pred_check_branch
      %24 = sbr.rel (0) target = $region13
    $region12: #{tpu_custom_call.1} parent=1 // pred_region
      %26 = vsyncadd [#allocation4], 0
      %s27 = sshll.u32 %s2, 4
      %s28 = int_to_ptr.hbm [resolvable:$true] %s27
      %s29 = sshll.u32 [#allocation3], 4
      %s30 = int_to_ptr.vmem [resolvable:$true] %s29
      %35 = dma.hbm_to_vmem [thread:$0]  %s28, 512, %s30, [#allocation4], 256, 256, 16
    $region13: #{tpu_custom_call.1} parent=1 // pred_fallthru
      _
    // Predicated region
    $region14: #{tpu_custom_call.1} parent=1 // pred_check
      _
    $region15: #{tpu_custom_call.1} parent=1 // pred_check_branch
      %37 = sbr.rel (0) target = $region17
    $region16: #{tpu_custom_call.1} parent=1 // pred_region
      _
    $region17: #{tpu_custom_call.1} parent=1 // pred_fallthru
      _
    // Predicated region
    $region18: #{tpu_custom_call.1} parent=1 // pred_check
      _
    $region19: #{tpu_custom_call.1} parent=1 // pred_check_branch
      %39 = sbr.rel (0) target = $region21
    $region20: #{tpu_custom_call.1} parent=1 // pred_region
      _
    $region21: #{tpu_custom_call.1} parent=1 // pred_fallthru
      _
    // Predicated region
    $region22: #{tpu_custom_call.1} parent=1 // pred_check
      _
    $region23: #{tpu_custom_call.1} parent=1 // pred_check_branch
      %41 = sbr.rel (0) target = $region25
    $region24: #{tpu_custom_call.1} parent=1 // pred_region
      _
    $region25: #{tpu_custom_call.1} parent=1 // pred_fallthru
      _
    // Predicated region
    $region26: #{tpu_custom_call.1} parent=1 // pred_check
      _
    $region27: #{tpu_custom_call.1} parent=1 // pred_check_branch
      %43 = sbr.rel (0) target = $region29
    $region28: #{tpu_custom_call.1} parent=1 // pred_region
      _
    $region29: #{tpu_custom_call.1} parent=1 // pred_fallthru
      _
    // Predicated region
    $region30: #{tpu_custom_call.1} parent=1 // pred_check
      _
    $region31: #{tpu_custom_call.1} parent=1 // pred_check_branch
      %45 = sbr.rel (0) target = $region33
    $region32: #{tpu_custom_call.1} parent=1 // pred_region
      _
    $region33: #{tpu_custom_call.1} parent=1 // pred_fallthru
      _
    // Predicated region
    $region34: #{tpu_custom_call.1} parent=1 // pred_check
      _
    $region35: #{tpu_custom_call.1} parent=1 // pred_check_branch
      %47 = sbr.rel (0) target = $region37
    $region36: #{tpu_custom_call.1} parent=1 // pred_region
      _
    $region37: #{tpu_custom_call.1} parent=1 // pred_fallthru
      _
    // Predicated region
    $region38: #{tpu_custom_call.1} parent=1 // pred_check
      _
    $region39: #{tpu_custom_call.1} parent=1 // pred_check_branch
      %49 = sbr.rel (0) target = $region41
    $region40: #{tpu_custom_call.1} parent=1 // pred_region
      _
    $region41: #{tpu_custom_call.1} parent=1 // pred_fallthru
      _
    // Predicated region
    $region42: #{tpu_custom_call.1} parent=1 // pred_check
      _
    $region43: #{tpu_custom_call.1} parent=1 // pred_check_branch
      %51 = sbr.rel (0) target = $region45
    $region44: #{tpu_custom_call.1} parent=1 // pred_region
      %53 = dma.done [#allocation4], 512
    $region45: #{tpu_custom_call.1} parent=1 // pred_fallthru
      _
    %v54 = vld [vmem:[%s0] sm:$0xff]
    %v55 = vld [vmem:[%s0 + $0x8] sm:$0xff]
    %v56 = vlaneseq
    %v57 = vand.u32 %v56, 127
    %58 = vset.pattern.permute.xlu0 0
    %59 = vperm.xlu0 %58, %v54
    %v60 = vpop.permute.xlu0 %59
    %61 = vset.pattern.permute.xlu0 0
    %62 = vperm.xlu0 %61, %v55
    %v63 = vpop.permute.xlu0 %62
    %vm64 = vcmp.eq.s32.totalorder %v57, %v60
    %vm65 = vcmp.eq.s32.totalorder %v57, %v63
    %v66 = vsel %vm64, 1, 0
    %v67 = vsel %vm65, 1, 0
    %v68 = vcvt.s32.f32 %v66
    %v69 = vcvt.s32.f32 %v67
    %v70 = vld [vmem:[%s1] sm:$0xff]
    %v71 = vld [vmem:[%s1 + $0x8] sm:$0xff]
    %v72 = vld [vmem:[%s1 + $0x10] sm:$0xff]
    %v73 = vld [vmem:[%s1 + $0x18] sm:$0xff]
    %v74 = vld [vmem:[%s1 + $0x20] sm:$0xff]
    %v75 = vld [vmem:[%s1 + $0x28] sm:$0xff]
    %v76 = vld [vmem:[%s1 + $0x30] sm:$0x3]
    %vm77 = vcmask 408576
    %v79 = vsel %vm77, %v68, 0
    %v82 = vsel %vm77, %v69, 0
    %vm84 = vcmask 1041408
    %v86 = vsel %vm84, %v76, 0
    %88 = vmatpush.msra.mxu0 0.0
    %89 = vmatpush.msra.mxu0 0.0
    %90 = vmatpush.msra.mxu0 0.0
    %91 = vmatpush.msra.mxu0 0.0
    %92 = vmatpush.msra.mxu0 0.0
    %93 = vmatpush.msra.mxu0 0.0
    %94 = vmatpush.msra.mxu0 0.0
    %95 = vmatpush.msra.mxu0 0.0
    %96 = vmatpush.msra.mxu0 0.0
    %97 = vmatpush.msra.mxu0 %v86
    %98 = vmatpush.msra.mxu0 %v75
    %99 = vmatpush.msra.mxu0 %v74
    %100 = vmatpush.msra.mxu0 %v73
    %101 = vmatpush.msra.mxu0 %v72
    %102 = vmatpush.msra.mxu0 %v71
    %103 = vmatpush.msra.mxu0 %v70
    %104 = vmatmul.f32.gmra.mxu0 %v79
    %v105 = vpop.f32.mrf.mxu0
    %v106 = vadd.f32 0.0, %v105
    %107 = vmatmul.f32.gmra.mxu0 %v82
    %v108 = vpop.f32.mrf.mxu0
    %v109 = vadd.f32 0.0, %v108
    %110 = vdwg.mxu0
    %v111 = vld [vmem:[#allocation3] sm:$0xff]
    %v112 = vld [vmem:[#allocation3 + $0x8] sm:$0xff]
    %v113 = vld [vmem:[#allocation3 + $0x10] sm:$0xff]
    %v114 = vld [vmem:[#allocation3 + $0x18] sm:$0xff]
    %v115 = vld [vmem:[%s4] sm:$0x3]
    %v117 = vperm.slane %v115, 0
    %v118 = vperm.slane %v115, 1
    %vm121 = vcmask 130048
    %v123 = vsel %vm121, %v106, 0
    %v126 = vsel %vm121, %v109, 0
    %128 = vmatpush.msra.mxu0 0.0
    %129 = vmatpush.msra.mxu0 0.0
    %130 = vmatpush.msra.mxu0 0.0
    %131 = vmatpush.msra.mxu0 0.0
    %132 = vmatpush.msra.mxu0 0.0
    %133 = vmatpush.msra.mxu0 0.0
    %134 = vmatpush.msra.mxu0 0.0
    %135 = vmatpush.msra.mxu0 0.0
    %136 = vmatpush.msra.mxu0 0.0
    %137 = vmatpush.msra.mxu0 0.0
    %138 = vmatpush.msra.mxu0 0.0
    %139 = vmatpush.msra.mxu0 0.0
    %140 = vmatpush.msra.mxu0 0.0
    %141 = vmatpush.msra.mxu0 0.0
    %142 = vmatpush.msra.mxu0 %v113
    %143 = vmatpush.msra.mxu0 %v111
    %144 = vmatmul.f32.gmra.mxu0 %v123
    %v145 = vpop.f32.mrf.mxu0
    %v146 = vadd.f32 %v117, %v145
    %147 = vmatmul.f32.gmra.mxu0 %v126
    %v148 = vpop.f32.mrf.mxu0
    %v149 = vadd.f32 %v117, %v148
    %150 = vdwg.mxu0
    %151 = vmatpush.msra.mxu0 0.0
    %152 = vmatpush.msra.mxu0 0.0
    %153 = vmatpush.msra.mxu0 0.0
    %154 = vmatpush.msra.mxu0 0.0
    %155 = vmatpush.msra.mxu0 0.0
    %156 = vmatpush.msra.mxu0 0.0
    %157 = vmatpush.msra.mxu0 0.0
    %158 = vmatpush.msra.mxu0 0.0
    %159 = vmatpush.msra.mxu0 0.0
    %160 = vmatpush.msra.mxu0 0.0
    %161 = vmatpush.msra.mxu0 0.0
    %162 = vmatpush.msra.mxu0 0.0
    %163 = vmatpush.msra.mxu0 0.0
    %164 = vmatpush.msra.mxu0 0.0
    %165 = vmatpush.msra.mxu0 %v114
    %166 = vmatpush.msra.mxu0 %v112
    %167 = vmatmul.f32.gmra.mxu0 %v123
    %v168 = vpop.f32.mrf.mxu0
    %v169 = vadd.f32 %v118, %v168
    %170 = vmatmul.f32.gmra.mxu0 %v126
    %v171 = vpop.f32.mrf.mxu0
    %v172 = vadd.f32 %v118, %v171
    %173 = vdwg.mxu0
    %v174 = vld [vmem:[%s3] sm:$0xff]
    %v175 = vld [vmem:[%s3 + $0x8] sm:$0xff]
    %v176 = vld [vmem:[%s3 + $0x10] sm:$0xff]
    %v177 = vld [vmem:[%s3 + $0x18] sm:$0xff]
    %v178 = vld [vmem:[%s3 + $0x20] sm:$0xff]
    %v179 = vld [vmem:[%s3 + $0x28] sm:$0xff]
    %v180 = vld [vmem:[%s3 + $0x30] sm:$0xff]
    %v181 = vld [vmem:[%s3 + $0x38] sm:$0xff]
    %v182 = vld [vmem:[%s3 + $0x40] sm:$0xff]
    %v183 = vld [vmem:[%s3 + $0x48] sm:$0xff]
    %v184 = vld [vmem:[%s3 + $0x50] sm:$0xff]
    %v185 = vld [vmem:[%s3 + $0x58] sm:$0xff]
    %v186 = vld [vmem:[%s3 + $0x60] sm:$0xff]
    %v187 = vld [vmem:[%s3 + $0x68] sm:$0xff]
    %v188 = vld [vmem:[%s3 + $0x70] sm:$0xff]
    %v189 = vld [vmem:[%s3 + $0x78] sm:$0xff]
    %v190 = vld [vmem:[%s5] sm:$0xff]
    %v191 = vld [vmem:[%s5 + $0x8] sm:$0xff]
    %v192 = vld [vmem:[%s5 + $0x10] sm:$0xff]
    %v193 = vld [vmem:[%s5 + $0x18] sm:$0xff]
    %v194 = vld [vmem:[%s5 + $0x20] sm:$0xff]
    %v195 = vld [vmem:[%s5 + $0x28] sm:$0xff]
    %v196 = vld [vmem:[%s5 + $0x30] sm:$0xff]
    %v197 = vld [vmem:[%s5 + $0x38] sm:$0xff]
    %v198 = vld [vmem:[%s6] sm:$0x1]
    %vm199 = vcmask 523264
    %v201 = vsel %vm199, 0.0, 0
    %203 = vmatpush.msra.mxu0 0.0
    %204 = vmatpush.msra.mxu0 0.0
    %205 = vmatpush.msra.mxu0 0.0
    %206 = vmatpush.msra.mxu0 0.0
    %207 = vmatpush.msra.mxu0 0.0
    %208 = vmatpush.msra.mxu0 0.0
    %209 = vmatpush.msra.mxu0 0.0
    %210 = vmatpush.msra.mxu0 0.0
    %211 = vmatpush.msra.mxu0 %v188
    %212 = vmatpush.msra.mxu0 %v186
    %213 = vmatpush.msra.mxu0 %v184
    %214 = vmatpush.msra.mxu0 %v182
    %215 = vmatpush.msra.mxu0 %v180
    %216 = vmatpush.msra.mxu0 %v178
    %217 = vmatpush.msra.mxu0 %v176
    %218 = vmatpush.msra.mxu0 %v174
    %219 = vmatmul.f32.gmra.mxu0 %v201
    %v220 = vpop.f32.mrf.mxu0
    %v221 = vadd.f32 0.0, %v220
    %222 = vdwg.mxu0
    %223 = vmatpush.msra.mxu0 0.0
    %224 = vmatpush.msra.mxu0 0.0
    %225 = vmatpush.msra.mxu0 0.0
    %226 = vmatpush.msra.mxu0 0.0
    %227 = vmatpush.msra.mxu0 0.0
    %228 = vmatpush.msra.mxu0 0.0
    %229 = vmatpush.msra.mxu0 0.0
    %230 = vmatpush.msra.mxu0 0.0
    %231 = vmatpush.msra.mxu0 %v189
    %232 = vmatpush.msra.mxu0 %v187
    %233 = vmatpush.msra.mxu0 %v185
    %234 = vmatpush.msra.mxu0 %v183
    %235 = vmatpush.msra.mxu0 %v181
    %236 = vmatpush.msra.mxu0 %v179
    %237 = vmatpush.msra.mxu0 %v177
    %238 = vmatpush.msra.mxu0 %v175
    %239 = vmatmul.f32.gmra.mxu0 %v201
    %v240 = vpop.f32.mrf.mxu0
    %v241 = vadd.f32 0.0, %v240
    %242 = vdwg.mxu0
    %v243 = vadd.f32 %v146, %v221
    %v244 = vadd.f32 %v169, %v241
    %v245 = vxor.u32 %v243, 2147483648
    %v246 = vmul.f32 %v245, 1.442695
    %v247 = vpow.pop %v246
    %v248 = vadd.f32 %v247, 1.0
    %v249 = vrcp.pop %v248
    %v250 = vmul.f32 %v248, %v249
    %v251 = vsub.f32 1.0, %v250
    %v252 = vmul.f32 %v249, %v251
    %v253 = vadd.f32 %v249, %v252
    %vm254 = vweird.f32 %v248
    %vm255 = vweird.f32 %v249
    %vm256 = vmor %vm254, %vm255
    %v257 = vsel %vm256, %v249, %v253
    %v258 = vand.u32 2147483647, %v248
    %vm259 = vcmp.eq.f32.partialorder %v258, 8.507059e+37
    %v260 = vand.u32 %v248, 2147483648
    %v261 = vor.u32 1.1754944e-38, %v260
    %v262 = vsel %vm259, %v261, %v257
    %v263 = vmul.f32 1.0, %v262
    %v264 = vtanh.pop %v244
    %v265 = vxor.u32 %v244, 2147483648
    %v266 = vmul.f32 %v265, 1.442695
    %v267 = vpow.pop %v266
    %v268 = vadd.f32 %v267, 1.0
    %v269 = vrcp.pop %v268
    %v270 = vmul.f32 %v268, %v269
    %v271 = vsub.f32 1.0, %v270
    %v272 = vmul.f32 %v269, %v271
    %v273 = vadd.f32 %v269, %v272
    %vm274 = vweird.f32 %v268
    %vm275 = vweird.f32 %v269
    %vm276 = vmor %vm274, %vm275
    %v277 = vsel %vm276, %v269, %v273
    %v278 = vand.u32 2147483647, %v268
    %vm279 = vcmp.eq.f32.partialorder %v278, 8.507059e+37
    %v280 = vand.u32 %v268, 2147483648
    %v281 = vor.u32 1.1754944e-38, %v280
    %v282 = vsel %vm279, %v281, %v277
    %v283 = vmul.f32 1.0, %v282
    %v284 = vmul.f32 %v263, 0.0
    %v285 = vmul.f32 %v263, %v264
    %287 = vrot.lane.b32.xlu0 %v285, 64
    %v288 = vpop.permute.xlu0 %287
    %v290 = vadd.f32 %v284, %v288
    %v291 = vtanh.pop %v290
    %v292 = vmul.f32 %v283, %v291
    %294 = vrot.lane.b32.xlu0 %v292, 64
    %v295 = vpop.permute.xlu0 %294
    %v296 = vsel %vm199, %v295, 0
    %298 = vmatpush.msra.mxu0 0.0
    %299 = vmatpush.msra.mxu0 0.0
    %300 = vmatpush.msra.mxu0 0.0
    %301 = vmatpush.msra.mxu0 0.0
    %302 = vmatpush.msra.mxu0 0.0
    %303 = vmatpush.msra.mxu0 0.0
    %304 = vmatpush.msra.mxu0 0.0
    %305 = vmatpush.msra.mxu0 0.0
    %306 = vmatpush.msra.mxu0 %v197
    %307 = vmatpush.msra.mxu0 %v196
    %308 = vmatpush.msra.mxu0 %v195
    %309 = vmatpush.msra.mxu0 %v194
    %310 = vmatpush.msra.mxu0 %v193
    %311 = vmatpush.msra.mxu0 %v192
    %312 = vmatpush.msra.mxu0 %v191
    %313 = vmatpush.msra.mxu0 %v190
    %314 = vmatmul.f32.gmra.mxu0 %v296
    %v315 = vpop.f32.mrf.mxu0
    %v316 = vadd.f32 0.0, %v315
    %317 = vdwg.mxu0
    %v319 = vperm.slane %v198, 0
    %320 = vrot.lane.b32.xlu0 %v319, 64
    %v321 = vpop.permute.xlu0 %320
    %v323 = vmul.f32 %v292, %v321
    %325 = vrot.lane.b32.xlu0 %v323, 64
    %v326 = vpop.permute.xlu0 %325
    %vm328 = vcmask 517120
    %v329 = vsel %vm328, %v326, 0.0
    %330 = vadd.xlane.f32.xlu0 %v329
    %v331 = vpop.xlane.xlu0 %330
    %v332 = vmul.f32 %v316, %v331
    %v333 = vadd.f32 %v332, 0.0
    %334 = vmatpush.msra.mxu0 0.0
    %335 = vmatpush.msra.mxu0 0.0
    %336 = vmatpush.msra.mxu0 0.0
    %337 = vmatpush.msra.mxu0 0.0
    %338 = vmatpush.msra.mxu0 0.0
    %339 = vmatpush.msra.mxu0 0.0
    %340 = vmatpush.msra.mxu0 0.0
    %341 = vmatpush.msra.mxu0 0.0
    %342 = vmatpush.msra.mxu0 %v188
    %343 = vmatpush.msra.mxu0 %v186
    %344 = vmatpush.msra.mxu0 %v184
    %345 = vmatpush.msra.mxu0 %v182
    %346 = vmatpush.msra.mxu0 %v180
    %347 = vmatpush.msra.mxu0 %v178
    %348 = vmatpush.msra.mxu0 %v176
    %349 = vmatpush.msra.mxu0 %v174
    %350 = vmatmul.f32.gmra.mxu0 %v296
    %v351 = vpop.f32.mrf.mxu0
    %v352 = vadd.f32 0.0, %v351
    %353 = vdwg.mxu0
    %354 = vmatpush.msra.mxu0 0.0
    %355 = vmatpush.msra.mxu0 0.0
    %356 = vmatpush.msra.mxu0 0.0
    %357 = vmatpush.msra.mxu0 0.0
    %358 = vmatpush.msra.mxu0 0.0
    %359 = vmatpush.msra.mxu0 0.0
    %360 = vmatpush.msra.mxu0 0.0
    %361 = vmatpush.msra.mxu0 0.0
    %362 = vmatpush.msra.mxu0 %v189
    %363 = vmatpush.msra.mxu0 %v187
    %364 = vmatpush.msra.mxu0 %v185
    %365 = vmatpush.msra.mxu0 %v183
    %366 = vmatpush.msra.mxu0 %v181
    %367 = vmatpush.msra.mxu0 %v179
    %368 = vmatpush.msra.mxu0 %v177
    %369 = vmatpush.msra.mxu0 %v175
    %370 = vmatmul.f32.gmra.mxu0 %v296
    %v371 = vpop.f32.mrf.mxu0
    %v372 = vadd.f32 0.0, %v371
    %373 = vdwg.mxu0
    %v376 = vrot.slane %v352, 6
    %v377 = vrot.slane %v372, 6
    %v380 = vadd.f32 %v146, %v376
    %v381 = vadd.f32 %v169, %v377
    %v382 = vxor.u32 %v380, 2147483648
    %v383 = vmul.f32 %v382, 1.442695
    %v384 = vpow.pop %v383
    %v385 = vadd.f32 %v384, 1.0
    %v386 = vrcp.pop %v385
    %v387 = vmul.f32 %v385, %v386
    %v388 = vsub.f32 1.0, %v387
    %v389 = vmul.f32 %v386, %v388
    %v390 = vadd.f32 %v386, %v389
    %vm391 = vweird.f32 %v385
    %vm392 = vweird.f32 %v386
    %vm393 = vmor %vm391, %vm392
    %v394 = vsel %vm393, %v386, %v390
    %v395 = vand.u32 2147483647, %v385
    %vm396 = vcmp.eq.f32.partialorder %v395, 8.507059e+37
    %v397 = vand.u32 %v385, 2147483648
    %v398 = vor.u32 1.1754944e-38, %v397
    %v399 = vsel %vm396, %v398, %v394
    %v400 = vmul.f32 1.0, %v399
    %v401 = vtanh.pop %v381
    %v402 = vxor.u32 %v381, 2147483648
    %v403 = vmul.f32 %v402, 1.442695
    %v404 = vpow.pop %v403
    %v405 = vadd.f32 %v404, 1.0
    %v406 = vrcp.pop %v405
    %v407 = vmul.f32 %v405, %v406
    %v408 = vsub.f32 1.0, %v407
    %v409 = vmul.f32 %v406, %v408
    %v410 = vadd.f32 %v406, %v409
    %vm411 = vweird.f32 %v405
    %vm412 = vweird.f32 %v406
    %vm413 = vmor %vm411, %vm412
    %v414 = vsel %vm413, %v406, %v410
    %v415 = vand.u32 2147483647, %v405
    %vm416 = vcmp.eq.f32.partialorder %v415, 8.507059e+37
    %v417 = vand.u32 %v405, 2147483648
    %v418 = vor.u32 1.1754944e-38, %v417
    %v419 = vsel %vm416, %v418, %v414
    %v420 = vmul.f32 1.0, %v419
    %v422 = vrot.slane %v290, 6
    %v424 = vmul.f32 %v400, %v422
    %v425 = vmul.f32 %v400, %v401
    %427 = vrot.lane.b32.xlu0 %v425, 64
    %v428 = vpop.permute.xlu0 %427
    %v430 = vadd.f32 %v424, %v428
    %v431 = vtanh.pop %v430
    %v432 = vmul.f32 %v420, %v431
    %v434 = vrot.slane %v432, 2
    %435 = vrot.lane.b32.xlu0 %v434, 64
    %v436 = vpop.permute.xlu0 %435
    %v437 = vsel %vm199, %v436, 0
    %439 = vmatpush.msra.mxu0 0.0
    %440 = vmatpush.msra.mxu0 0.0
    %441 = vmatpush.msra.mxu0 0.0
    %442 = vmatpush.msra.mxu0 0.0
    %443 = vmatpush.msra.mxu0 0.0
    %444 = vmatpush.msra.mxu0 0.0
    %445 = vmatpush.msra.mxu0 0.0
    %446 = vmatpush.msra.mxu0 0.0
    %447 = vmatpush.msra.mxu0 %v197
    %448 = vmatpush.msra.mxu0 %v196
    %449 = vmatpush.msra.mxu0 %v195
    %450 = vmatpush.msra.mxu0 %v194
    %451 = vmatpush.msra.mxu0 %v193
    %452 = vmatpush.msra.mxu0 %v192
    %453 = vmatpush.msra.mxu0 %v191
    %454 = vmatpush.msra.mxu0 %v190
    %455 = vmatmul.f32.gmra.mxu0 %v437
    %v456 = vpop.f32.mrf.mxu0
    %v457 = vadd.f32 0.0, %v456
    %458 = vdwg.mxu0
    %v459 = vmul.f32 %v432, %v321
    %461 = vrot.lane.b32.xlu0 %v459, 64
    %v462 = vpop.permute.xlu0 %461
    %vm464 = vcmask 519170
    %v465 = vsel %vm464, %v462, 0.0
    %466 = vadd.xlane.f32.xlu0 %v465
    %v467 = vpop.xlane.xlu0 %466
    %v469 = vrot.slane %v467, 2
    %v471 = vmul.f32 %v457, %v469
    %v472 = vadd.f32 %v333, %v471
    %473 = vmatpush.msra.mxu0 0.0
    %474 = vmatpush.msra.mxu0 0.0
    %475 = vmatpush.msra.mxu0 0.0
    %476 = vmatpush.msra.mxu0 0.0
    %477 = vmatpush.msra.mxu0 0.0
    %478 = vmatpush.msra.mxu0 0.0
    %479 = vmatpush.msra.mxu0 0.0
    %480 = vmatpush.msra.mxu0 0.0
    %481 = vmatpush.msra.mxu0 %v188
    %482 = vmatpush.msra.mxu0 %v186
    %483 = vmatpush.msra.mxu0 %v184
    %484 = vmatpush.msra.mxu0 %v182
    %485 = vmatpush.msra.mxu0 %v180
    %486 = vmatpush.msra.mxu0 %v178
    %487 = vmatpush.msra.mxu0 %v176
    %488 = vmatpush.msra.mxu0 %v174
    %489 = vmatmul.f32.gmra.mxu0 %v437
    %v490 = vpop.f32.mrf.mxu0
    %v491 = vadd.f32 0.0, %v490
    %492 = vdwg.mxu0
    %493 = vmatpush.msra.mxu0 0.0
    %494 = vmatpush.msra.mxu0 0.0
    %495 = vmatpush.msra.mxu0 0.0
    %496 = vmatpush.msra.mxu0 0.0
    %497 = vmatpush.msra.mxu0 0.0
    %498 = vmatpush.msra.mxu0 0.0
    %499 = vmatpush.msra.mxu0 0.0
    %500 = vmatpush.msra.mxu0 0.0
    %501 = vmatpush.msra.mxu0 %v189
    %502 = vmatpush.msra.mxu0 %v187
    %503 = vmatpush.msra.mxu0 %v185
    %504 = vmatpush.msra.mxu0 %v183
    %505 = vmatpush.msra.mxu0 %v181
    %506 = vmatpush.msra.mxu0 %v179
    %507 = vmatpush.msra.mxu0 %v177
    %508 = vmatpush.msra.mxu0 %v175
    %509 = vmatmul.f32.gmra.mxu0 %v437
    %v510 = vpop.f32.mrf.mxu0
    %v511 = vadd.f32 0.0, %v510
    %512 = vdwg.mxu0
    %v515 = vrot.slane %v491, 4
    %v516 = vrot.slane %v511, 4
    %v519 = vadd.f32 %v146, %v515
    %v520 = vadd.f32 %v169, %v516
    %v521 = vxor.u32 %v519, 2147483648
    %v522 = vmul.f32 %v521, 1.442695
    %v523 = vpow.pop %v522
    %v524 = vadd.f32 %v523, 1.0
    %v525 = vrcp.pop %v524
    %v526 = vmul.f32 %v524, %v525
    %v527 = vsub.f32 1.0, %v526
    %v528 = vmul.f32 %v525, %v527
    %v529 = vadd.f32 %v525, %v528
    %vm530 = vweird.f32 %v524
    %vm531 = vweird.f32 %v525
    %vm532 = vmor %vm530, %vm531
    %v533 = vsel %vm532, %v525, %v529
    %v534 = vand.u32 2147483647, %v524
    %vm535 = vcmp.eq.f32.partialorder %v534, 8.507059e+37
    %v536 = vand.u32 %v524, 2147483648
    %v537 = vor.u32 1.1754944e-38, %v536
    %v538 = vsel %vm535, %v537, %v533
    %v539 = vmul.f32 1.0, %v538
    %v540 = vtanh.pop %v520
    %v541 = vxor.u32 %v520, 2147483648
    %v542 = vmul.f32 %v541, 1.442695
    %v543 = vpow.pop %v542
    %v544 = vadd.f32 %v543, 1.0
    %v545 = vrcp.pop %v544
    %v546 = vmul.f32 %v544, %v545
    %v547 = vsub.f32 1.0, %v546
    %v548 = vmul.f32 %v545, %v547
    %v549 = vadd.f32 %v545, %v548
    %vm550 = vweird.f32 %v544
    %vm551 = vweird.f32 %v545
    %vm552 = vmor %vm550, %vm551
    %v553 = vsel %vm552, %v545, %v549
    %v554 = vand.u32 2147483647, %v544
    %vm555 = vcmp.eq.f32.partialorder %v554, 8.507059e+37
    %v556 = vand.u32 %v544, 2147483648
    %v557 = vor.u32 1.1754944e-38, %v556
    %v558 = vsel %vm555, %v557, %v553
    %v559 = vmul.f32 1.0, %v558
    %v561 = vrot.slane %v430, 6
    %v563 = vmul.f32 %v539, %v561
    %v564 = vmul.f32 %v539, %v540
    %566 = vrot.lane.b32.xlu0 %v564, 64
    %v567 = vpop.permute.xlu0 %566
    %v569 = vadd.f32 %v563, %v567
    %v570 = vtanh.pop %v569
    %v571 = vmul.f32 %v559, %v570
    %v573 = vrot.slane %v571, 4
    %574 = vrot.lane.b32.xlu0 %v573, 64
    %v575 = vpop.permute.xlu0 %574
    %v576 = vsel %vm199, %v575, 0
    %578 = vmatpush.msra.mxu0 0.0
    %579 = vmatpush.msra.mxu0 0.0
    %580 = vmatpush.msra.mxu0 0.0
    %581 = vmatpush.msra.mxu0 0.0
    %582 = vmatpush.msra.mxu0 0.0
    %583 = vmatpush.msra.mxu0 0.0
    %584 = vmatpush.msra.mxu0 0.0
    %585 = vmatpush.msra.mxu0 0.0
    %586 = vmatpush.msra.mxu0 %v197
    %587 = vmatpush.msra.mxu0 %v196
    %588 = vmatpush.msra.mxu0 %v195
    %589 = vmatpush.msra.mxu0 %v194
    %590 = vmatpush.msra.mxu0 %v193
    %591 = vmatpush.msra.mxu0 %v192
    %592 = vmatpush.msra.mxu0 %v191
    %593 = vmatpush.msra.mxu0 %v190
    %594 = vmatmul.f32.gmra.mxu0 %v576
    %v595 = vpop.f32.mrf.mxu0
    %v596 = vadd.f32 0.0, %v595
    %597 = vdwg.mxu0
    %v598 = vmul.f32 %v571, %v321
    %600 = vrot.lane.b32.xlu0 %v598, 64
    %v601 = vpop.permute.xlu0 %600
    %vm603 = vcmask 521220
    %v604 = vsel %vm603, %v601, 0.0
    %605 = vadd.xlane.f32.xlu0 %v604
    %v606 = vpop.xlane.xlu0 %605
    %v608 = vrot.slane %v606, 4
    %v610 = vmul.f32 %v596, %v608
    %v611 = vadd.f32 %v472, %v610
    %612 = vmatpush.msra.mxu0 0.0
    %613 = vmatpush.msra.mxu0 0.0
    %614 = vmatpush.msra.mxu0 0.0
    %615 = vmatpush.msra.mxu0 0.0
    %616 = vmatpush.msra.mxu0 0.0
    %617 = vmatpush.msra.mxu0 0.0
    %618 = vmatpush.msra.mxu0 0.0
    %619 = vmatpush.msra.mxu0 0.0
    %620 = vmatpush.msra.mxu0 %v188
    %621 = vmatpush.msra.mxu0 %v186
    %622 = vmatpush.msra.mxu0 %v184
    %623 = vmatpush.msra.mxu0 %v182
    %624 = vmatpush.msra.mxu0 %v180
    %625 = vmatpush.msra.mxu0 %v178
    %626 = vmatpush.msra.mxu0 %v176
    %627 = vmatpush.msra.mxu0 %v174
    %628 = vmatmul.f32.gmra.mxu0 %v576
    %v629 = vpop.f32.mrf.mxu0
    %v630 = vadd.f32 0.0, %v629
    %631 = vdwg.mxu0
    %632 = vmatpush.msra.mxu0 0.0
    %633 = vmatpush.msra.mxu0 0.0
    %634 = vmatpush.msra.mxu0 0.0
    %635 = vmatpush.msra.mxu0 0.0
    %636 = vmatpush.msra.mxu0 0.0
    %637 = vmatpush.msra.mxu0 0.0
    %638 = vmatpush.msra.mxu0 0.0
    %639 = vmatpush.msra.mxu0 0.0
    %640 = vmatpush.msra.mxu0 %v189
    %641 = vmatpush.msra.mxu0 %v187
    %642 = vmatpush.msra.mxu0 %v185
    %643 = vmatpush.msra.mxu0 %v183
    %644 = vmatpush.msra.mxu0 %v181
    %645 = vmatpush.msra.mxu0 %v179
    %646 = vmatpush.msra.mxu0 %v177
    %647 = vmatpush.msra.mxu0 %v175
    %648 = vmatmul.f32.gmra.mxu0 %v576
    %v649 = vpop.f32.mrf.mxu0
    %v650 = vadd.f32 0.0, %v649
    %651 = vdwg.mxu0
    %v654 = vrot.slane %v630, 2
    %v655 = vrot.slane %v650, 2
    %v658 = vadd.f32 %v146, %v654
    %v659 = vadd.f32 %v169, %v655
    %v660 = vxor.u32 %v658, 2147483648
    %v661 = vmul.f32 %v660, 1.442695
    %v662 = vpow.pop %v661
    %v663 = vadd.f32 %v662, 1.0
    %v664 = vrcp.pop %v663
    %v665 = vmul.f32 %v663, %v664
    %v666 = vsub.f32 1.0, %v665
    %v667 = vmul.f32 %v664, %v666
    %v668 = vadd.f32 %v664, %v667
    %vm669 = vweird.f32 %v663
    %vm670 = vweird.f32 %v664
    %vm671 = vmor %vm669, %vm670
    %v672 = vsel %vm671, %v664, %v668
    %v673 = vand.u32 2147483647, %v663
    %vm674 = vcmp.eq.f32.partialorder %v673, 8.507059e+37
    %v675 = vand.u32 %v663, 2147483648
    %v676 = vor.u32 1.1754944e-38, %v675
    %v677 = vsel %vm674, %v676, %v672
    %v678 = vmul.f32 1.0, %v677
    %v679 = vtanh.pop %v659
    %v680 = vxor.u32 %v659, 2147483648
    %v681 = vmul.f32 %v680, 1.442695
    %v682 = vpow.pop %v681
    %v683 = vadd.f32 %v682, 1.0
    %v684 = vrcp.pop %v683
    %v685 = vmul.f32 %v683, %v684
    %v686 = vsub.f32 1.0, %v685
    %v687 = vmul.f32 %v684, %v686
    %v688 = vadd.f32 %v684, %v687
    %vm689 = vweird.f32 %v683
    %vm690 = vweird.f32 %v684
    %vm691 = vmor %vm689, %vm690
    %v692 = vsel %vm691, %v684, %v688
    %v693 = vand.u32 2147483647, %v683
    %vm694 = vcmp.eq.f32.partialorder %v693, 8.507059e+37
    %v695 = vand.u32 %v683, 2147483648
    %v696 = vor.u32 1.1754944e-38, %v695
    %v697 = vsel %vm694, %v696, %v692
    %v698 = vmul.f32 1.0, %v697
    %v700 = vrot.slane %v569, 6
    %v702 = vmul.f32 %v678, %v700
    %v703 = vmul.f32 %v678, %v679
    %705 = vrot.lane.b32.xlu0 %v703, 64
    %v706 = vpop.permute.xlu0 %705
    %v708 = vadd.f32 %v702, %v706
    %v709 = vtanh.pop %v708
    %v710 = vmul.f32 %v698, %v709
    %v712 = vrot.slane %v710, 6
    %713 = vrot.lane.b32.xlu0 %v712, 64
    %v714 = vpop.permute.xlu0 %713
    %v715 = vsel %vm199, %v714, 0
    %717 = vmatpush.msra.mxu0 0.0
    %718 = vmatpush.msra.mxu0 0.0
    %719 = vmatpush.msra.mxu0 0.0
    %720 = vmatpush.msra.mxu0 0.0
    %721 = vmatpush.msra.mxu0 0.0
    %722 = vmatpush.msra.mxu0 0.0
    %723 = vmatpush.msra.mxu0 0.0
    %724 = vmatpush.msra.mxu0 0.0
    %725 = vmatpush.msra.mxu0 %v197
    %726 = vmatpush.msra.mxu0 %v196
    %727 = vmatpush.msra.mxu0 %v195
    %728 = vmatpush.msra.mxu0 %v194
    %729 = vmatpush.msra.mxu0 %v193
    %730 = vmatpush.msra.mxu0 %v192
    %731 = vmatpush.msra.mxu0 %v191
    %732 = vmatpush.msra.mxu0 %v190
    %733 = vmatmul.f32.gmra.mxu0 %v715
    %v734 = vpop.f32.mrf.mxu0
    %v735 = vadd.f32 0.0, %v734
    %736 = vdwg.mxu0
    %v737 = vmul.f32 %v710, %v321
    %739 = vrot.lane.b32.xlu0 %v737, 64
    %v740 = vpop.permute.xlu0 %739
    %vm742 = vcmask 523270
    %v743 = vsel %vm742, %v740, 0.0
    %744 = vadd.xlane.f32.xlu0 %v743
    %v745 = vpop.xlane.xlu0 %744
    %v747 = vrot.slane %v745, 6
    %v749 = vmul.f32 %v735, %v747
    %v750 = vadd.f32 %v611, %v749
    %751 = vmatpush.msra.mxu0 0.0
    %752 = vmatpush.msra.mxu0 0.0
    %753 = vmatpush.msra.mxu0 0.0
    %754 = vmatpush.msra.mxu0 0.0
    %755 = vmatpush.msra.mxu0 0.0
    %756 = vmatpush.msra.mxu0 0.0
    %757 = vmatpush.msra.mxu0 0.0
    %758 = vmatpush.msra.mxu0 0.0
    %759 = vmatpush.msra.mxu0 %v188
    %760 = vmatpush.msra.mxu0 %v186
    %761 = vmatpush.msra.mxu0 %v184
    %762 = vmatpush.msra.mxu0 %v182
    %763 = vmatpush.msra.mxu0 %v180
    %764 = vmatpush.msra.mxu0 %v178
    %765 = vmatpush.msra.mxu0 %v176
    %766 = vmatpush.msra.mxu0 %v174
    %767 = vmatmul.f32.gmra.mxu0 %v715
    %v768 = vpop.f32.mrf.mxu0
    %v769 = vadd.f32 0.0, %v768
    %770 = vdwg.mxu0
    %771 = vmatpush.msra.mxu0 0.0
    %772 = vmatpush.msra.mxu0 0.0
    %773 = vmatpush.msra.mxu0 0.0
    %774 = vmatpush.msra.mxu0 0.0
    %775 = vmatpush.msra.mxu0 0.0
    %776 = vmatpush.msra.mxu0 0.0
    %777 = vmatpush.msra.mxu0 0.0
    %778 = vmatpush.msra.mxu0 0.0
    %779 = vmatpush.msra.mxu0 %v189
    %780 = vmatpush.msra.mxu0 %v187
    %781 = vmatpush.msra.mxu0 %v185
    %782 = vmatpush.msra.mxu0 %v183
    %783 = vmatpush.msra.mxu0 %v181
    %784 = vmatpush.msra.mxu0 %v179
    %785 = vmatpush.msra.mxu0 %v177
    %786 = vmatpush.msra.mxu0 %v175
    %787 = vmatmul.f32.gmra.mxu0 %v715
    %v788 = vpop.f32.mrf.mxu0
    %v789 = vadd.f32 0.0, %v788
    %790 = vdwg.mxu0
    %v791 = vadd.f32 %v149, %v769
    %v792 = vadd.f32 %v172, %v789
    %v793 = vxor.u32 %v791, 2147483648
    %v794 = vmul.f32 %v793, 1.442695
    %v795 = vpow.pop %v794
    %v796 = vadd.f32 %v795, 1.0
    %v797 = vrcp.pop %v796
    %v798 = vmul.f32 %v796, %v797
    %v799 = vsub.f32 1.0, %v798
    %v800 = vmul.f32 %v797, %v799
    %v801 = vadd.f32 %v797, %v800
    %vm802 = vweird.f32 %v796
    %vm803 = vweird.f32 %v797
    %vm804 = vmor %vm802, %vm803
    %v805 = vsel %vm804, %v797, %v801
    %v806 = vand.u32 2147483647, %v796
    %vm807 = vcmp.eq.f32.partialorder %v806, 8.507059e+37
    %v808 = vand.u32 %v796, 2147483648
    %v809 = vor.u32 1.1754944e-38, %v808
    %v810 = vsel %vm807, %v809, %v805
    %v811 = vmul.f32 1.0, %v810
    %v812 = vtanh.pop %v792
    %v813 = vxor.u32 %v792, 2147483648
    %v814 = vmul.f32 %v813, 1.442695
    %v815 = vpow.pop %v814
    %v816 = vadd.f32 %v815, 1.0
    %v817 = vrcp.pop %v816
    %v818 = vmul.f32 %v816, %v817
    %v819 = vsub.f32 1.0, %v818
    %v820 = vmul.f32 %v817, %v819
    %v821 = vadd.f32 %v817, %v820
    %vm822 = vweird.f32 %v816
    %vm823 = vweird.f32 %v817
    %vm824 = vmor %vm822, %vm823
    %v825 = vsel %vm824, %v817, %v821
    %v826 = vand.u32 2147483647, %v816
    %vm827 = vcmp.eq.f32.partialorder %v826, 8.507059e+37
    %v828 = vand.u32 %v816, 2147483648
    %v829 = vor.u32 1.1754944e-38, %v828
    %v830 = vsel %vm827, %v829, %v825
    %v831 = vmul.f32 1.0, %v830
    %v833 = vrot.slane %v708, 6
    %v835 = vmul.f32 %v811, %v833
    %v836 = vmul.f32 %v811, %v812
    %838 = vrot.lane.b32.xlu0 %v836, 64
    %v839 = vpop.permute.xlu0 %838
    %v841 = vadd.f32 %v835, %v839
    %v842 = vtanh.pop %v841
    %v843 = vmul.f32 %v831, %v842
    %845 = vrot.lane.b32.xlu0 %v843, 64
    %v846 = vpop.permute.xlu0 %845
    %v847 = vsel %vm199, %v846, 0
    %849 = vmatpush.msra.mxu0 0.0
    %850 = vmatpush.msra.mxu0 0.0
    %851 = vmatpush.msra.mxu0 0.0
    %852 = vmatpush.msra.mxu0 0.0
    %853 = vmatpush.msra.mxu0 0.0
    %854 = vmatpush.msra.mxu0 0.0
    %855 = vmatpush.msra.mxu0 0.0
    %856 = vmatpush.msra.mxu0 0.0
    %857 = vmatpush.msra.mxu0 %v197
    %858 = vmatpush.msra.mxu0 %v196
    %859 = vmatpush.msra.mxu0 %v195
    %860 = vmatpush.msra.mxu0 %v194
    %861 = vmatpush.msra.mxu0 %v193
    %862 = vmatpush.msra.mxu0 %v192
    %863 = vmatpush.msra.mxu0 %v191
    %864 = vmatpush.msra.mxu0 %v190
    %865 = vmatmul.f32.gmra.mxu0 %v847
    %v866 = vpop.f32.mrf.mxu0
    %v867 = vadd.f32 0.0, %v866
    %868 = vdwg.mxu0
    %v869 = vmul.f32 %v843, %v321
    %871 = vrot.lane.b32.xlu0 %v869, 64
    %v872 = vpop.permute.xlu0 %871
    %v874 = vsel %vm328, %v872, 0.0
    %875 = vadd.xlane.f32.xlu0 %v874
    %v876 = vpop.xlane.xlu0 %875
    %v877 = vmul.f32 %v867, %v876
    %v878 = vadd.f32 %v750, %v877
    %879 = vmatpush.msra.mxu0 0.0
    %880 = vmatpush.msra.mxu0 0.0
    %881 = vmatpush.msra.mxu0 0.0
    %882 = vmatpush.msra.mxu0 0.0
    %883 = vmatpush.msra.mxu0 0.0
    %884 = vmatpush.msra.mxu0 0.0
    %885 = vmatpush.msra.mxu0 0.0
    %886 = vmatpush.msra.mxu0 0.0
    %887 = vmatpush.msra.mxu0 %v188
    %888 = vmatpush.msra.mxu0 %v186
    %889 = vmatpush.msra.mxu0 %v184
    %890 = vmatpush.msra.mxu0 %v182
    %891 = vmatpush.msra.mxu0 %v180
    %892 = vmatpush.msra.mxu0 %v178
    %893 = vmatpush.msra.mxu0 %v176
    %894 = vmatpush.msra.mxu0 %v174
    %895 = vmatmul.f32.gmra.mxu0 %v847
    %v896 = vpop.f32.mrf.mxu0
    %v897 = vadd.f32 0.0, %v896
    %898 = vdwg.mxu0
    %899 = vmatpush.msra.mxu0 0.0
    %900 = vmatpush.msra.mxu0 0.0
    %901 = vmatpush.msra.mxu0 0.0
    %902 = vmatpush.msra.mxu0 0.0
    %903 = vmatpush.msra.mxu0 0.0
    %904 = vmatpush.msra.mxu0 0.0
    %905 = vmatpush.msra.mxu0 0.0
    %906 = vmatpush.msra.mxu0 0.0
    %907 = vmatpush.msra.mxu0 %v189
    %908 = vmatpush.msra.mxu0 %v187
    %909 = vmatpush.msra.mxu0 %v185
    %910 = vmatpush.msra.mxu0 %v183
    %911 = vmatpush.msra.mxu0 %v181
    %912 = vmatpush.msra.mxu0 %v179
    %913 = vmatpush.msra.mxu0 %v177
    %914 = vmatpush.msra.mxu0 %v175
    %915 = vmatmul.f32.gmra.mxu0 %v847
    %v916 = vpop.f32.mrf.mxu0
    %v917 = vadd.f32 0.0, %v916
    %918 = vdwg.mxu0
    %v921 = vrot.slane %v897, 6
    %v922 = vrot.slane %v917, 6
    %v925 = vadd.f32 %v149, %v921
    %v926 = vadd.f32 %v172, %v922
    %v927 = vxor.u32 %v925, 2147483648
    %v928 = vmul.f32 %v927, 1.442695
    %v929 = vpow.pop %v928
    %v930 = vadd.f32 %v929, 1.0
    %v931 = vrcp.pop %v930
    %v932 = vmul.f32 %v930, %v931
    %v933 = vsub.f32 1.0, %v932
    %v934 = vmul.f32 %v931, %v933
    %v935 = vadd.f32 %v931, %v934
    %vm936 = vweird.f32 %v930
    %vm937 = vweird.f32 %v931
    %vm938 = vmor %vm936, %vm937
    %v939 = vsel %vm938, %v931, %v935
    %v940 = vand.u32 2147483647, %v930
    %vm941 = vcmp.eq.f32.partialorder %v940, 8.507059e+37
    %v942 = vand.u32 %v930, 2147483648
    %v943 = vor.u32 1.1754944e-38, %v942
    %v944 = vsel %vm941, %v943, %v939
    %v945 = vmul.f32 1.0, %v944
    %v946 = vtanh.pop %v926
    %v947 = vxor.u32 %v926, 2147483648
    %v948 = vmul.f32 %v947, 1.442695
    %v949 = vpow.pop %v948
    %v950 = vadd.f32 %v949, 1.0
    %v951 = vrcp.pop %v950
    %v952 = vmul.f32 %v950, %v951
    %v953 = vsub.f32 1.0, %v952
    %v954 = vmul.f32 %v951, %v953
    %v955 = vadd.f32 %v951, %v954
    %vm956 = vweird.f32 %v950
    %vm957 = vweird.f32 %v951
    %vm958 = vmor %vm956, %vm957
    %v959 = vsel %vm958, %v951, %v955
    %v960 = vand.u32 2147483647, %v950
    %vm961 = vcmp.eq.f32.partialorder %v960, 8.507059e+37
    %v962 = vand.u32 %v950, 2147483648
    %v963 = vor.u32 1.1754944e-38, %v962
    %v964 = vsel %vm961, %v963, %v959
    %v965 = vmul.f32 1.0, %v964
    %v967 = vrot.slane %v841, 6
    %v969 = vmul.f32 %v945, %v967
    %v970 = vmul.f32 %v945, %v946
    %972 = vrot.lane.b32.xlu0 %v970, 64
    %v973 = vpop.permute.xlu0 %972
    %v975 = vadd.f32 %v969, %v973
    %v976 = vtanh.pop %v975
    %v977 = vmul.f32 %v965, %v976
    %v979 = vrot.slane %v977, 2
    %980 = vrot.lane.b32.xlu0 %v979, 64
    %v981 = vpop.permute.xlu0 %980
    %v982 = vsel %vm199, %v981, 0
    %984 = vmatpush.msra.mxu0 0.0
    %985 = vmatpush.msra.mxu0 0.0
    %986 = vmatpush.msra.mxu0 0.0
    %987 = vmatpush.msra.mxu0 0.0
    %988 = vmatpush.msra.mxu0 0.0
    %989 = vmatpush.msra.mxu0 0.0
    %990 = vmatpush.msra.mxu0 0.0
    %991 = vmatpush.msra.mxu0 0.0
    %992 = vmatpush.msra.mxu0 %v197
    %993 = vmatpush.msra.mxu0 %v196
    %994 = vmatpush.msra.mxu0 %v195
    %995 = vmatpush.msra.mxu0 %v194
    %996 = vmatpush.msra.mxu0 %v193
    %997 = vmatpush.msra.mxu0 %v192
    %998 = vmatpush.msra.mxu0 %v191
    %999 = vmatpush.msra.mxu0 %v190
    %1000 = vmatmul.f32.gmra.mxu0 %v982
    %v1001 = vpop.f32.mrf.mxu0
    %v1002 = vadd.f32 0.0, %v1001
    %1003 = vdwg.mxu0
    %v1004 = vmul.f32 %v977, %v321
    %1006 = vrot.lane.b32.xlu0 %v1004, 64
    %v1007 = vpop.permute.xlu0 %1006
    %v1009 = vsel %vm464, %v1007, 0.0
    %1010 = vadd.xlane.f32.xlu0 %v1009
    %v1011 = vpop.xlane.xlu0 %1010
    %v1013 = vrot.slane %v1011, 2
    %v1015 = vmul.f32 %v1002, %v1013
    %v1016 = vadd.f32 %v878, %v1015
    %1017 = vmatpush.msra.mxu0 0.0
    %1018 = vmatpush.msra.mxu0 0.0
    %1019 = vmatpush.msra.mxu0 0.0
    %1020 = vmatpush.msra.mxu0 0.0
    %1021 = vmatpush.msra.mxu0 0.0
    %1022 = vmatpush.msra.mxu0 0.0
    %1023 = vmatpush.msra.mxu0 0.0
    %1024 = vmatpush.msra.mxu0 0.0
    %1025 = vmatpush.msra.mxu0 %v188
    %1026 = vmatpush.msra.mxu0 %v186
    %1027 = vmatpush.msra.mxu0 %v184
    %1028 = vmatpush.msra.mxu0 %v182
    %1029 = vmatpush.msra.mxu0 %v180
    %1030 = vmatpush.msra.mxu0 %v178
    %1031 = vmatpush.msra.mxu0 %v176
    %1032 = vmatpush.msra.mxu0 %v174
    %1033 = vmatmul.f32.gmra.mxu0 %v982
    %v1034 = vpop.f32.mrf.mxu0
    %v1035 = vadd.f32 0.0, %v1034
    %1036 = vdwg.mxu0
    %1037 = vmatpush.msra.mxu0 0.0
    %1038 = vmatpush.msra.mxu0 0.0
    %1039 = vmatpush.msra.mxu0 0.0
    %1040 = vmatpush.msra.mxu0 0.0
    %1041 = vmatpush.msra.mxu0 0.0
    %1042 = vmatpush.msra.mxu0 0.0
    %1043 = vmatpush.msra.mxu0 0.0
    %1044 = vmatpush.msra.mxu0 0.0
    %1045 = vmatpush.msra.mxu0 %v189
    %1046 = vmatpush.msra.mxu0 %v187
    %1047 = vmatpush.msra.mxu0 %v185
    %1048 = vmatpush.msra.mxu0 %v183
    %1049 = vmatpush.msra.mxu0 %v181
    %1050 = vmatpush.msra.mxu0 %v179
    %1051 = vmatpush.msra.mxu0 %v177
    %1052 = vmatpush.msra.mxu0 %v175
    %1053 = vmatmul.f32.gmra.mxu0 %v982
    %v1054 = vpop.f32.mrf.mxu0
    %v1055 = vadd.f32 0.0, %v1054
    %1056 = vdwg.mxu0
    %v1059 = vrot.slane %v1035, 4
    %v1060 = vrot.slane %v1055, 4
    %v1063 = vadd.f32 %v149, %v1059
    %v1064 = vadd.f32 %v172, %v1060
    %v1065 = vxor.u32 %v1063, 2147483648
    %v1066 = vmul.f32 %v1065, 1.442695
    %v1067 = vpow.pop %v1066
    %v1068 = vadd.f32 %v1067, 1.0
    %v1069 = vrcp.pop %v1068
    %v1070 = vmul.f32 %v1068, %v1069
    %v1071 = vsub.f32 1.0, %v1070
    %v1072 = vmul.f32 %v1069, %v1071
    %v1073 = vadd.f32 %v1069, %v1072
    %vm1074 = vweird.f32 %v1068
    %vm1075 = vweird.f32 %v1069
    %vm1076 = vmor %vm1074, %vm1075
    %v1077 = vsel %vm1076, %v1069, %v1073
    %v1078 = vand.u32 2147483647, %v1068
    %vm1079 = vcmp.eq.f32.partialorder %v1078, 8.507059e+37
    %v1080 = vand.u32 %v1068, 2147483648
    %v1081 = vor.u32 1.1754944e-38, %v1080
    %v1082 = vsel %vm1079, %v1081, %v1077
    %v1083 = vmul.f32 1.0, %v1082
    %v1084 = vtanh.pop %v1064
    %v1085 = vxor.u32 %v1064, 2147483648
    %v1086 = vmul.f32 %v1085, 1.442695
    %v1087 = vpow.pop %v1086
    %v1088 = vadd.f32 %v1087, 1.0
    %v1089 = vrcp.pop %v1088
    %v1090 = vmul.f32 %v1088, %v1089
    %v1091 = vsub.f32 1.0, %v1090
    %v1092 = vmul.f32 %v1089, %v1091
    %v1093 = vadd.f32 %v1089, %v1092
    %vm1094 = vweird.f32 %v1088
    %vm1095 = vweird.f32 %v1089
    %vm1096 = vmor %vm1094, %vm1095
    %v1097 = vsel %vm1096, %v1089, %v1093
    %v1098 = vand.u32 2147483647, %v1088
    %vm1099 = vcmp.eq.f32.partialorder %v1098, 8.507059e+37
    %v1100 = vand.u32 %v1088, 2147483648
    %v1101 = vor.u32 1.1754944e-38, %v1100
    %v1102 = vsel %vm1099, %v1101, %v1097
    %v1103 = vmul.f32 1.0, %v1102
    %v1105 = vrot.slane %v975, 6
    %v1107 = vmul.f32 %v1083, %v1105
    %v1108 = vmul.f32 %v1083, %v1084
    %1110 = vrot.lane.b32.xlu0 %v1108, 64
    %v1111 = vpop.permute.xlu0 %1110
    %v1113 = vadd.f32 %v1107, %v1111
    %v1114 = vtanh.pop %v1113
    %v1115 = vmul.f32 %v1103, %v1114
    %v1117 = vrot.slane %v1115, 4
    %1118 = vrot.lane.b32.xlu0 %v1117, 64
    %v1119 = vpop.permute.xlu0 %1118
    %v1120 = vsel %vm199, %v1119, 0
    %1122 = vmatpush.msra.mxu0 0.0
    %1123 = vmatpush.msra.mxu0 0.0
    %1124 = vmatpush.msra.mxu0 0.0
    %1125 = vmatpush.msra.mxu0 0.0
    %1126 = vmatpush.msra.mxu0 0.0
    %1127 = vmatpush.msra.mxu0 0.0
    %1128 = vmatpush.msra.mxu0 0.0
    %1129 = vmatpush.msra.mxu0 0.0
    %1130 = vmatpush.msra.mxu0 %v197
    %1131 = vmatpush.msra.mxu0 %v196
    %1132 = vmatpush.msra.mxu0 %v195
    %1133 = vmatpush.msra.mxu0 %v194
    %1134 = vmatpush.msra.mxu0 %v193
    %1135 = vmatpush.msra.mxu0 %v192
    %1136 = vmatpush.msra.mxu0 %v191
    %1137 = vmatpush.msra.mxu0 %v190
    %1138 = vmatmul.f32.gmra.mxu0 %v1120
    %v1139 = vpop.f32.mrf.mxu0
    %v1140 = vadd.f32 0.0, %v1139
    %1141 = vdwg.mxu0
    %v1142 = vmul.f32 %v1115, %v321
    %1144 = vrot.lane.b32.xlu0 %v1142, 64
    %v1145 = vpop.permute.xlu0 %1144
    %v1147 = vsel %vm603, %v1145, 0.0
    %1148 = vadd.xlane.f32.xlu0 %v1147
    %v1149 = vpop.xlane.xlu0 %1148
    %v1151 = vrot.slane %v1149, 4
    %v1153 = vmul.f32 %v1140, %v1151
    %v1154 = vadd.f32 %v1016, %v1153
    %1155 = vmatpush.msra.mxu0 0.0
    %1156 = vmatpush.msra.mxu0 0.0
    %1157 = vmatpush.msra.mxu0 0.0
    %1158 = vmatpush.msra.mxu0 0.0
    %1159 = vmatpush.msra.mxu0 0.0
    %1160 = vmatpush.msra.mxu0 0.0
    %1161 = vmatpush.msra.mxu0 0.0
    %1162 = vmatpush.msra.mxu0 0.0
    %1163 = vmatpush.msra.mxu0 %v188
    %1164 = vmatpush.msra.mxu0 %v186
    %1165 = vmatpush.msra.mxu0 %v184
    %1166 = vmatpush.msra.mxu0 %v182
    %1167 = vmatpush.msra.mxu0 %v180
    %1168 = vmatpush.msra.mxu0 %v178
    %1169 = vmatpush.msra.mxu0 %v176
    %1170 = vmatpush.msra.mxu0 %v174
    %1171 = vmatmul.f32.gmra.mxu0 %v1120
    %v1172 = vpop.f32.mrf.mxu0
    %v1173 = vadd.f32 0.0, %v1172
    %1174 = vdwg.mxu0
    %1175 = vmatpush.msra.mxu0 0.0
    %1176 = vmatpush.msra.mxu0 0.0
    %1177 = vmatpush.msra.mxu0 0.0
    %1178 = vmatpush.msra.mxu0 0.0
    %1179 = vmatpush.msra.mxu0 0.0
    %1180 = vmatpush.msra.mxu0 0.0
    %1181 = vmatpush.msra.mxu0 0.0
    %1182 = vmatpush.msra.mxu0 0.0
    %1183 = vmatpush.msra.mxu0 %v189
    %1184 = vmatpush.msra.mxu0 %v187
    %1185 = vmatpush.msra.mxu0 %v185
    %1186 = vmatpush.msra.mxu0 %v183
    %1187 = vmatpush.msra.mxu0 %v181
    %1188 = vmatpush.msra.mxu0 %v179
    %1189 = vmatpush.msra.mxu0 %v177
    %1190 = vmatpush.msra.mxu0 %v175
    %1191 = vmatmul.f32.gmra.mxu0 %v1120
    %v1192 = vpop.f32.mrf.mxu0
    %v1193 = vadd.f32 0.0, %v1192
    %1194 = vdwg.mxu0
    %v1197 = vrot.slane %v1173, 2
    %v1198 = vrot.slane %v1193, 2
    %v1201 = vadd.f32 %v149, %v1197
    %v1202 = vadd.f32 %v172, %v1198
    %v1203 = vxor.u32 %v1201, 2147483648
    %v1204 = vmul.f32 %v1203, 1.442695
    %v1205 = vpow.pop %v1204
    %v1206 = vadd.f32 %v1205, 1.0
    %v1207 = vrcp.pop %v1206
    %v1208 = vmul.f32 %v1206, %v1207
    %v1209 = vsub.f32 1.0, %v1208
    %v1210 = vmul.f32 %v1207, %v1209
    %v1211 = vadd.f32 %v1207, %v1210
    %vm1212 = vweird.f32 %v1206
    %vm1213 = vweird.f32 %v1207
    %vm1214 = vmor %vm1212, %vm1213
    %v1215 = vsel %vm1214, %v1207, %v1211
    %v1216 = vand.u32 2147483647, %v1206
    %vm1217 = vcmp.eq.f32.partialorder %v1216, 8.507059e+37
    %v1218 = vand.u32 %v1206, 2147483648
    %v1219 = vor.u32 1.1754944e-38, %v1218
    %v1220 = vsel %vm1217, %v1219, %v1215
    %v1221 = vmul.f32 1.0, %v1220
    %v1222 = vtanh.pop %v1202
    %v1223 = vxor.u32 %v1202, 2147483648
    %v1224 = vmul.f32 %v1223, 1.442695
    %v1225 = vpow.pop %v1224
    %v1226 = vadd.f32 %v1225, 1.0
    %v1227 = vrcp.pop %v1226
    %v1228 = vmul.f32 %v1226, %v1227
    %v1229 = vsub.f32 1.0, %v1228
    %v1230 = vmul.f32 %v1227, %v1229
    %v1231 = vadd.f32 %v1227, %v1230
    %vm1232 = vweird.f32 %v1226
    %vm1233 = vweird.f32 %v1227
    %vm1234 = vmor %vm1232, %vm1233
    %v1235 = vsel %vm1234, %v1227, %v1231
    %v1236 = vand.u32 2147483647, %v1226
    %vm1237 = vcmp.eq.f32.partialorder %v1236, 8.507059e+37
    %v1238 = vand.u32 %v1226, 2147483648
    %v1239 = vor.u32 1.1754944e-38, %v1238
    %v1240 = vsel %vm1237, %v1239, %v1235
    %v1241 = vmul.f32 1.0, %v1240
    %v1243 = vrot.slane %v1113, 6
    %v1245 = vmul.f32 %v1221, %v1243
    %v1246 = vmul.f32 %v1221, %v1222
    %1248 = vrot.lane.b32.xlu0 %v1246, 64
    %v1249 = vpop.permute.xlu0 %1248
    %v1251 = vadd.f32 %v1245, %v1249
    %v1252 = vtanh.pop %v1251
    %v1253 = vmul.f32 %v1241, %v1252
    %v1255 = vrot.slane %v1253, 6
    %1256 = vrot.lane.b32.xlu0 %v1255, 64
    %v1257 = vpop.permute.xlu0 %1256
    %v1258 = vsel %vm199, %v1257, 0
    %1260 = vmatpush.msra.mxu0 0.0
    %1261 = vmatpush.msra.mxu0 0.0
    %1262 = vmatpush.msra.mxu0 0.0
    %1263 = vmatpush.msra.mxu0 0.0
    %1264 = vmatpush.msra.mxu0 0.0
    %1265 = vmatpush.msra.mxu0 0.0
    %1266 = vmatpush.msra.mxu0 0.0
    %1267 = vmatpush.msra.mxu0 0.0
    %1268 = vmatpush.msra.mxu0 %v197
    %1269 = vmatpush.msra.mxu0 %v196
    %1270 = vmatpush.msra.mxu0 %v195
    %1271 = vmatpush.msra.mxu0 %v194
    %1272 = vmatpush.msra.mxu0 %v193
    %1273 = vmatpush.msra.mxu0 %v192
    %1274 = vmatpush.msra.mxu0 %v191
    %1275 = vmatpush.msra.mxu0 %v190
    %1276 = vmatmul.f32.gmra.mxu0 %v1258
    %v1277 = vpop.f32.mrf.mxu0
    %v1278 = vadd.f32 0.0, %v1277
    %1279 = vdwg.mxu0
    %v1280 = vmul.f32 %v1253, %v321
    %1282 = vrot.lane.b32.xlu0 %v1280, 64
    %v1283 = vpop.permute.xlu0 %1282
    %v1285 = vsel %vm742, %v1283, 0.0
    %1286 = vadd.xlane.f32.xlu0 %v1285
    %v1287 = vpop.xlane.xlu0 %1286
    %v1289 = vrot.slane %v1287, 6
    %v1291 = vmul.f32 %v1278, %v1289
    %v1292 = vadd.f32 %v1154, %v1291
    %v1293 = vld [vmem:[#allocation2] sm:$0x1]
    %v1295 = vperm.slane %v1293, 0
    %1296 = vset.pattern.permute.xlu0 0
    %1297 = vperm.xlu0 %1296, %v1295
    %v1298 = vpop.permute.xlu0 %1297
    %v1300 = vadd.f32 %v1292, %v1298
    %v1301 = vmax.f32 %v1300, 0.0
    %v1302 = vld [vmem:[%s8] sm:$0xf]
    %v1303 = vld [vmem:[%s9] sm:$0x1]
    %v1305 = vperm.slane %v1303, 0
    %vm1307 = vcmask 31744
    %v1309 = vsel %vm1307, %v1301, 0
    %vm1311 = vcmask 1043456
    %v1313 = vsel %vm1311, %v1302, 0
    %1315 = vmatpush.msra.mxu0 0.0
    %1316 = vmatpush.msra.mxu0 0.0
    %1317 = vmatpush.msra.mxu0 0.0
    %1318 = vmatpush.msra.mxu0 0.0
    %1319 = vmatpush.msra.mxu0 0.0
    %1320 = vmatpush.msra.mxu0 0.0
    %1321 = vmatpush.msra.mxu0 0.0
    %1322 = vmatpush.msra.mxu0 0.0
    %1323 = vmatpush.msra.mxu0 0.0
    %1324 = vmatpush.msra.mxu0 0.0
    %1325 = vmatpush.msra.mxu0 0.0
    %1326 = vmatpush.msra.mxu0 0.0
    %1327 = vmatpush.msra.mxu0 0.0
    %1328 = vmatpush.msra.mxu0 0.0
    %1329 = vmatpush.msra.mxu0 0.0
    %1330 = vmatpush.msra.mxu0 %v1313
    %1331 = vmatmul.f32.gmra.mxu0 %v1309
    %v1332 = vpop.f32.mrf.mxu0
    %v1333 = vadd.f32 %v1305, %v1332
    %1334 = vdwg.mxu0
    %v1335 = vmax.f32 %v1333, 0.0
    %vm1336 = vcmask 17408
    %v1337 = vsel %vm1336, %v1335, -inf
    %1338 = vmax.xlane.f32.xlu0 %v1337
    %v1339 = vpop.xlane.xlu0 %1338
    %v1340 = vsub.f32 %v1335, %v1339
    %v1341 = vmul.f32 %v1340, 1.442695
    %v1342 = vpow.pop %v1341
    %v1343 = vsel %vm1336, %v1342, 0.0
    %1344 = vadd.xlane.f32.xlu0 %v1343
    %v1345 = vpop.xlane.xlu0 %1344
    %v1346 = vrcp.pop %v1345
    %v1347 = vmul.f32 %v1342, %v1346
    %1348 = vst.msk [vmem:[#allocation6] sm:$0x3] %vm1336, %v1347
    // Predicated region
    $region46: #{tpu_custom_call.1} parent=1 // pred_check
      _
    $region47: #{tpu_custom_call.1} parent=1 // pred_check_branch
      %1350 = sbr.rel (0) target = $region49
    $region48: #{tpu_custom_call.1} parent=1 // pred_region
      %1352 = vsyncadd [#allocation5], 0
      %s1354 = sshll.u32 [#allocation6], 4
      %s1355 = int_to_ptr.vmem [resolvable:$true] %s1354
      %s1356 = sshll.u32 %s10, 4
      %s1357 = int_to_ptr.hbm [resolvable:$true] %s1356
      %1359 = dma.vmem_to_hbm [thread:$0]  %s1355, 32, %s1357, [#allocation5]
    $region49: #{tpu_custom_call.1} parent=1 // pred_fallthru
      _
    // Predicated region
    $region50: #{tpu_custom_call.1} parent=1 // pred_check
      _
    $region51: #{tpu_custom_call.1} parent=1 // pred_check_branch
      %1361 = sbr.rel (0) target = $region53
    $region52: #{tpu_custom_call.1} parent=1 // pred_region
      %1363 = dma.done [#allocation5], 32
    $region53: #{tpu_custom_call.1} parent=1 // pred_fallthru
      _
    %1364 = vsyncpa [#allocation4], 1
    %1365 = vsyncpa [#allocation5], 1

</llo_original>
